<compile_context>
chip_gen: v6e
topology: v6e:2x2x1
jax: 0.10.0
libtpu: 0.0.40
codegen_flags: <defaults>
</compile_context>

<pallas_src>
import jax
import jax.numpy as jnp
from jax.experimental import pallas as pl
from jax.experimental.pallas import tpu as pltpu

LANE = 128
SUBLANE_BF16 = 16          # bf16 packs 16 sublanes per vreg


def _round_up(n, m):
    return ((n + m - 1) // m) * m


# ----------------------------------------------------------------------------
# Kernel: one batch tile, all layers fused.
# ----------------------------------------------------------------------------
def vae_kernel(x_ref, eps_ref,
               w_in_ref, b_in_ref,     # Encoder.FC_input           [Dp, Hp]
               w_ml_ref, b_ml_ref,     # fused FC_mean || FC_var    [Hp, 2*Lp]
               w_dh_ref, b_dh_ref,     # Decoder.FC_hidden          [Lp, Hp]
               w_do_ref, b_do_ref,     # Decoder.FC_output          [Hp, Op]
               xhat_ref, mulv_ref):
    l_pad = eps_ref.shape[-1]                       # static (padded latent dim)

    x = x_ref[...]                                  # bf16 (TB, Dp)

    # --- Encoder ---
    h = jnp.dot(x, w_in_ref[...], preferred_element_type=jnp.float32) + b_in_ref[...]
    h = jnp.maximum(h, 0.0)                         # relu, f32

    # fused mean || log_var projection: one MXU pass, one lane-dense result
    mulv = (jnp.dot(h.astype(jnp.bfloat16), w_ml_ref[...],
                    preferred_element_type=jnp.float32) + b_ml_ref[...])
    mean = mulv[:, :l_pad]                          # split at a 128-lane boundary
    log_var = mulv[:, l_pad:]

    # --- reparameterization: epsilon ~ Uniform[0,1) (torch.rand_like) ---
    std = jnp.exp(0.5 * log_var)                    # exp -> EUP
    z = mean + std * eps_ref[...].astype(jnp.float32)

    # --- Decoder ---
    dh = (jnp.dot(z.astype(jnp.bfloat16), w_dh_ref[...],
                  preferred_element_type=jnp.float32) + b_dh_ref[...])
    dh = jnp.maximum(dh, 0.0)
    logits = (jnp.dot(dh.astype(jnp.bfloat16), w_do_ref[...],
                      preferred_element_type=jnp.float32) + b_do_ref[...])

    # sigmoid: exp + approx reciprocal both live on the EUP slot (VALU stays free)
    xhat = pl.reciprocal(1.0 + jnp.exp(-logits), approx=True)
    xhat_ref[...] = xhat.astype(xhat_ref.dtype)     # bf16 store: halves HBM writeback
    mulv_ref[...] = mulv                            # mean || log_var, one wide store


# ----------------------------------------------------------------------------
# Parameter packing: pad to lane multiples, fuse mu/log_var, cast weights bf16.
# ----------------------------------------------------------------------------
def pack_params(params, dims):
    D, H, L, O = dims
    Dp, Hp, Lp, Op = (_round_up(d, LANE) for d in dims)

    def pad_w(w, rp, cp):
        out = jnp.zeros((rp, cp), jnp.bfloat16)
        return out.at[: w.shape[0], : w.shape[1]].set(w.astype(jnp.bfloat16))

    def pad_b(b, cp):
        b = b.reshape(1, -1).astype(jnp.float32)
        return jnp.zeros((1, cp), jnp.float32).at[:, : b.shape[1]].set(b)

    w_ml = jnp.concatenate(
        [pad_w(params["w_mu"], Hp, Lp), pad_w(params["w_lv"], Hp, Lp)], axis=1)
    b_ml = jnp.concatenate(
        [pad_b(params["b_mu"], Lp), pad_b(params["b_lv"], Lp)], axis=1)

    return dict(
        w_in=pad_w(params["w_in"], Dp, Hp), b_in=pad_b(params["b_in"], Hp),
        w_ml=w_ml, b_ml=b_ml,
        w_dh=pad_w(params["w_dh"], Lp, Hp), b_dh=pad_b(params["b_dh"], Hp),
        w_do=pad_w(params["w_do"], Hp, Op), b_do=pad_b(params["b_do"], Op),
    )


# ----------------------------------------------------------------------------
# Batch-tile choice: big tiles to amortize grid-step overhead; >= 2 steps for
# mid-size batches so the "parallel" axis actually splits across v7x's two TCs.
# ----------------------------------------------------------------------------
def _pick_batch_tile(B):
    if B >= 1024:
        return 512                                            # grid >= 2 steps
    if B > 32:
        return _round_up(pl.cdiv(B, 2), SUBLANE_BF16)          # exactly ~2 steps
    return _round_up(B, SUBLANE_BF16)                          # tiny batch: 1 step


# ----------------------------------------------------------------------------
# Wrapper: batch-tiled grid, weights resident (and single-buffered) in VMEM.
# ----------------------------------------------------------------------------
def vae_forward(x, packed, dims, eps):
    D, H, L, O = dims
    Dp, Hp, Lp, Op = (_round_up(d, LANE) for d in dims)
    B = x.shape[0]

    TB = _pick_batch_tile(B)
    Bp = _round_up(B, TB)                 # TB divides Bp exactly by construction
    grid = (Bp // TB,)

    # Inputs: skip the wrapper-side padded copy entirely when no padding is needed
    # (avoids an extra HBM round trip of x in the mem-bound regime).
    if B == Bp and D == Dp:
        x_p = x.astype(jnp.bfloat16)
    else:
        x_p = jnp.zeros((Bp, Dp), jnp.bfloat16).at[:B, :D].set(x.astype(jnp.bfloat16))
    if B == Bp and L == Lp:
        eps_p = eps.astype(jnp.bfloat16)
    else:
        eps_p = jnp.zeros((Bp, Lp), jnp.bfloat16).at[:B, :L].set(eps.astype(jnp.bfloat16))

    def batch_spec(cols):
        return pl.BlockSpec((TB, cols), lambda i: (i, 0))

    def resident_spec(shape, single_buffer):
        # block never changes across the grid -> one buffer is enough
        if single_buffer:
            return pl.BlockSpec(shape, lambda i: (0, 0), pipeline_mode=pl.Buffered(1))
        return pl.BlockSpec(shape, lambda i: (0, 0))

    out_specs = (batch_spec(Op), batch_spec(2 * Lp))
    out_shape = (
        jax.ShapeDtypeStruct((Bp, Op), jnp.bfloat16),       # x_hat (padded, bf16)
        jax.ShapeDtypeStruct((Bp, 2 * Lp), jnp.float32),    # mean || log_var (padded)
    )

    # --- explicit VMEM budget + scheduling cost hint (computed, not guessed) ---
    weight_bytes = (2 * (Dp * Hp + Hp * 2 * Lp + Lp * Hp + Hp * Op)
                    + 4 * (Hp + 2 * Lp + Hp + Op))
    stream_bytes_per_step = TB * (2 * Dp + 2 * Lp + 2 * Op + 4 * 2 * Lp)
    vmem_limit = int(min(max(2 * weight_bytes + 2 * stream_bytes_per_step + (8 << 20),
                             16 << 20),
                         48 << 20))
    flops = 2 * Bp * (Dp * Hp + Hp * 2 * Lp + Lp * Hp + Hp * Op)
    bytes_accessed = (Bp * (2 * Dp + 2 * Lp)            # x, eps (bf16)
                      + weight_bytes                     # resident weights/biases
                      + Bp * (2 * Op + 4 * 2 * Lp))      # x_hat (bf16), mulv (f32)
    cost = pl.CostEstimate(flops=flops,
                           transcendentals=Bp * (Lp + 2 * Op),
                           bytes_accessed=bytes_accessed)

    def run(single_buffer):
        in_specs = [
            batch_spec(Dp),                                   # x
            batch_spec(Lp),                                   # eps
            resident_spec((Dp, Hp), single_buffer),           # FC_input W
            resident_spec((1, Hp), single_buffer),            # FC_input b
            resident_spec((Hp, 2 * Lp), single_buffer),       # fused mu||lv W
            resident_spec((1, 2 * Lp), single_buffer),        # fused mu||lv b
            resident_spec((Lp, Hp), single_buffer),           # FC_hidden W
            resident_spec((1, Hp), single_buffer),            # FC_hidden b
            resident_spec((Hp, Op), single_buffer),           # FC_output W
            resident_spec((1, Op), single_buffer),            # FC_output b
        ]
        return pl.pallas_call(
            vae_kernel,
            grid=grid,
            in_specs=in_specs,
            out_specs=out_specs,
            out_shape=out_shape,
            compiler_params=pltpu.CompilerParams(
                dimension_semantics=("parallel",),            # batch tiles across TCs
                vmem_limit_bytes=vmem_limit,
            ),
            cost_estimate=cost,
        )(
            x_p, eps_p,
            packed["w_in"], packed["b_in"],
            packed["w_ml"], packed["b_ml"],
            packed["w_dh"], packed["b_dh"],
            packed["w_do"], packed["b_do"],
        )

    try:
        xhat_p, mulv_p = run(single_buffer=True)
    except Exception:
        # pipeline_mode=pl.Buffered(1) unsupported on this JAX build -> default buffering.
        xhat_p, mulv_p = run(single_buffer=False)

    x_hat = xhat_p[:B, :O].astype(jnp.float32)        # restore the module's f32 output
    mean = mulv_p[:B, :L]
    log_var = mulv_p[:B, Lp:Lp + L]
    return x_hat, mean, log_var


# ----------------------------------------------------------------------------
# Init + pure-JAX reference (same bf16-operand / f32-accumulate recipe)
# ----------------------------------------------------------------------------
def init_params(key, input_dim, hidden_dim, latent_dim, output_dim):
    ks = jax.random.split(key, 10)

    def lin(kw, kb, fan_in, fan_out):
        # weights stored pre-transposed vs torch: [in, out]
        w = jax.random.normal(kw, (fan_in, fan_out), jnp.float32) * 0.05
        b = jax.random.normal(kb, (1, fan_out), jnp.float32) * 0.01
        return w, b

    w_in, b_in = lin(ks[0], ks[1], input_dim, hidden_dim)
    w_mu, b_mu = lin(ks[2], ks[3], hidden_dim, latent_dim)
    w_lv, b_lv = lin(ks[4], ks[5], hidden_dim, latent_dim)
    w_dh, b_dh = lin(ks[6], ks[7], latent_dim, hidden_dim)
    w_do, b_do = lin(ks[8], ks[9], hidden_dim, output_dim)
    return dict(w_in=w_in, b_in=b_in, w_mu=w_mu, b_mu=b_mu,
                w_lv=w_lv, b_lv=b_lv, w_dh=w_dh, b_dh=b_dh,
                w_do=w_do, b_do=b_do)


def vae_reference(x, params, eps):
    def dot_bf16(a, w):
        return jnp.dot(a.astype(jnp.bfloat16), w.astype(jnp.bfloat16),
                       preferred_element_type=jnp.float32)
    h = jnp.maximum(dot_bf16(x, params["w_in"]) + params["b_in"], 0.0)
    mean = dot_bf16(h, params["w_mu"]) + params["b_mu"]
    log_var = dot_bf16(h, params["w_lv"]) + params["b_lv"]
    z = mean + jnp.exp(0.5 * log_var) * eps
    dh = jnp.maximum(dot_bf16(z, params["w_dh"]) + params["b_dh"], 0.0)
    logits = dot_bf16(dh, params["w_do"]) + params["b_do"]
    return 1.0 / (1.0 + jnp.exp(-logits)), mean, log_var


if __name__ == "__main__":
    # Small shapes consistent with the VAE forward: x is [batch, input_dim]
    B, input_dim, hidden_dim, latent_dim = 8, 64, 32, 16
    output_dim = input_dim
    dims = (input_dim, hidden_dim, latent_dim, output_dim)

    key = jax.random.PRNGKey(0)
    k_x, k_p, k_eps = jax.random.split(key, 3)
    x = jax.random.normal(k_x, (B, input_dim), jnp.float32)
    params = init_params(k_p, *dims)
    packed = pack_params(params, dims)

    # epsilon ~ Uniform[0,1)  (torch.rand_like semantics of the reference module)
    eps = jax.random.uniform(k_eps, (B, latent_dim), jnp.float32)

    x_hat, mean, log_var = vae_forward(x, packed, dims, eps)
    jax.block_until_ready((x_hat, mean, log_var))

    assert x_hat.shape == (B, output_dim)
    assert mean.shape == (B, latent_dim)
    assert log_var.shape == (B, latent_dim)
    assert bool(jnp.all(jnp.isfinite(x_hat)))
    assert bool(jnp.all((x_hat >= 0.0) & (x_hat <= 1.0 + 1e-3)))   # sigmoid range

    # correctness vs. pure-JAX reference using the same bf16/f32 recipe and eps
    xr, mr, lr = vae_reference(x, params, eps)
    assert bool(jnp.allclose(x_hat, xr, atol=1e-2, rtol=1e-2))
    assert bool(jnp.allclose(mean, mr, atol=1e-2, rtol=1e-2))
    assert bool(jnp.allclose(log_var, lr, atol=1e-2, rtol=1e-2))

    print("KERNEL_OK")
</pallas_src>

<mosaic_0001>
module attributes {stable_mosaic.version = 11 : i64} {
  func.func @vae_kernel(%arg0: i32, %arg1: memref<16x128xbf16, #tpu.memory_space<vmem>>, %arg2: memref<16x128xbf16, #tpu.memory_space<vmem>>, %arg3: memref<128x128xbf16, #tpu.memory_space<vmem>>, %arg4: memref<1x128xf32, #tpu.memory_space<vmem>>, %arg5: memref<128x256xbf16, #tpu.memory_space<vmem>>, %arg6: memref<1x256xf32, #tpu.memory_space<vmem>>, %arg7: memref<128x128xbf16, #tpu.memory_space<vmem>>, %arg8: memref<1x128xf32, #tpu.memory_space<vmem>>, %arg9: memref<128x128xbf16, #tpu.memory_space<vmem>>, %arg10: memref<1x128xf32, #tpu.memory_space<vmem>>, %arg11: memref<16x128xbf16, #tpu.memory_space<vmem>>, %arg12: memref<16x256xf32, #tpu.memory_space<vmem>>) attributes {dimension_semantics = [#tpu.dimension_semantics<parallel>], iteration_bounds = array<i64: 1>, scalar_prefetch = 0 : i64, scratch_operands = 0 : i64, tpu.core_type = #tpu.core_type<tc>, window_params = [{transform_indices = @transform_0, window_bounds = array<i64: 16, 128>}, {transform_indices = @transform_1, window_bounds = array<i64: 16, 128>}, {pipeline_mode = #tpu.pipeline_mode<synchronous>, transform_indices = @transform_2, window_bounds = array<i64: 128, 128>}, {pipeline_mode = #tpu.pipeline_mode<synchronous>, transform_indices = @transform_3, window_bounds = array<i64: 1, 128>}, {pipeline_mode = #tpu.pipeline_mode<synchronous>, transform_indices = @transform_4, window_bounds = array<i64: 128, 256>}, {pipeline_mode = #tpu.pipeline_mode<synchronous>, transform_indices = @transform_5, window_bounds = array<i64: 1, 256>}, {pipeline_mode = #tpu.pipeline_mode<synchronous>, transform_indices = @transform_6, window_bounds = array<i64: 128, 128>}, {pipeline_mode = #tpu.pipeline_mode<synchronous>, transform_indices = @transform_7, window_bounds = array<i64: 1, 128>}, {pipeline_mode = #tpu.pipeline_mode<synchronous>, transform_indices = @transform_8, window_bounds = array<i64: 128, 128>}, {pipeline_mode = #tpu.pipeline_mode<synchronous>, transform_indices = @transform_9, window_bounds = array<i64: 1, 128>}, {transform_indices = @transform_10, window_bounds = array<i64: 16, 128>}, {transform_indices = @transform_11, window_bounds = array<i64: 16, 256>}]} {
    %c0 = arith.constant 0 : index
    %c0_0 = arith.constant 0 : index
    %0 = vector.load %arg1[%c0, %c0_0] : memref<16x128xbf16, #tpu.memory_space<vmem>>, vector<16x128xbf16>
    %c0_1 = arith.constant 0 : index
    %c0_2 = arith.constant 0 : index
    %1 = vector.load %arg3[%c0_1, %c0_2] : memref<128x128xbf16, #tpu.memory_space<vmem>>, vector<128x128xbf16>
    %cst = arith.constant dense<0.000000e+00> : vector<16x128xf32>
    %2 = tpu.matmul %0, %1, %cst {dimension_numbers = #tpu.dot_dimension_numbers<[1], [0], [0], [1], [0, 0, 1, 1], [], []>} : vector<16x128xbf16>, vector<128x128xbf16>, vector<16x128xf32> -> vector<16x128xf32>
    %c0_3 = arith.constant 0 : index
    %c0_4 = arith.constant 0 : index
    %3 = vector.load %arg4[%c0_3, %c0_4] : memref<1x128xf32, #tpu.memory_space<vmem>>, vector<1x128xf32>
    %4 = vector.broadcast %3 : vector<1x128xf32> to vector<16x128xf32>
    %5 = arith.addf %2, %4 : vector<16x128xf32>
    %cst_5 = arith.constant 0.000000e+00 : f32
    %6 = vector.broadcast %cst_5 : f32 to vector<16x128xf32>
    %7 = arith.maximumf %5, %6 : vector<16x128xf32>
    %8 = arith.truncf %7 : vector<16x128xf32> to vector<16x128xbf16>
    %c0_6 = arith.constant 0 : index
    %c0_7 = arith.constant 0 : index
    %9 = vector.load %arg5[%c0_6, %c0_7] : memref<128x256xbf16, #tpu.memory_space<vmem>>, vector<128x256xbf16>
    %cst_8 = arith.constant dense<0.000000e+00> : vector<16x256xf32>
    %10 = tpu.matmul %8, %9, %cst_8 {dimension_numbers = #tpu.dot_dimension_numbers<[1], [0], [0], [1], [0, 0, 1, 1], [], []>} : vector<16x128xbf16>, vector<128x256xbf16>, vector<16x256xf32> -> vector<16x256xf32>
    %c0_9 = arith.constant 0 : index
    %c0_10 = arith.constant 0 : index
    %11 = vector.load %arg6[%c0_9, %c0_10] : memref<1x256xf32, #tpu.memory_space<vmem>>, vector<1x256xf32>
    %12 = vector.broadcast %11 : vector<1x256xf32> to vector<16x256xf32>
    %13 = arith.addf %10, %12 : vector<16x256xf32>
    %14 = vector.extract_strided_slice %13 {offsets = [0, 0], sizes = [16, 128], strides = [1, 1]} : vector<16x256xf32> to vector<16x128xf32>
    %15 = vector.extract_strided_slice %13 {offsets = [0, 128], sizes = [16, 128], strides = [1, 1]} : vector<16x256xf32> to vector<16x128xf32>
    %cst_11 = arith.constant 5.000000e-01 : f32
    %16 = vector.broadcast %cst_11 : f32 to vector<16x128xf32>
    %17 = arith.mulf %16, %15 : vector<16x128xf32>
    %18 = math.exp %17 : vector<16x128xf32>
    %c0_12 = arith.constant 0 : index
    %c0_13 = arith.constant 0 : index
    %19 = vector.load %arg2[%c0_12, %c0_13] : memref<16x128xbf16, #tpu.memory_space<vmem>>, vector<16x128xbf16>
    %20 = arith.extf %19 : vector<16x128xbf16> to vector<16x128xf32>
    %21 = arith.mulf %18, %20 : vector<16x128xf32>
    %22 = arith.addf %14, %21 : vector<16x128xf32>
    %23 = arith.truncf %22 : vector<16x128xf32> to vector<16x128xbf16>
    %c0_14 = arith.constant 0 : index
    %c0_15 = arith.constant 0 : index
    %24 = vector.load %arg7[%c0_14, %c0_15] : memref<128x128xbf16, #tpu.memory_space<vmem>>, vector<128x128xbf16>
    %cst_16 = arith.constant dense<0.000000e+00> : vector<16x128xf32>
    %25 = tpu.matmul %23, %24, %cst_16 {dimension_numbers = #tpu.dot_dimension_numbers<[1], [0], [0], [1], [0, 0, 1, 1], [], []>} : vector<16x128xbf16>, vector<128x128xbf16>, vector<16x128xf32> -> vector<16x128xf32>
    %c0_17 = arith.constant 0 : index
    %c0_18 = arith.constant 0 : index
    %26 = vector.load %arg8[%c0_17, %c0_18] : memref<1x128xf32, #tpu.memory_space<vmem>>, vector<1x128xf32>
    %27 = vector.broadcast %26 : vector<1x128xf32> to vector<16x128xf32>
    %28 = arith.addf %25, %27 : vector<16x128xf32>
    %cst_19 = arith.constant 0.000000e+00 : f32
    %29 = vector.broadcast %cst_19 : f32 to vector<16x128xf32>
    %30 = arith.maximumf %28, %29 : vector<16x128xf32>
    %31 = arith.truncf %30 : vector<16x128xf32> to vector<16x128xbf16>
    %c0_20 = arith.constant 0 : index
    %c0_21 = arith.constant 0 : index
    %32 = vector.load %arg9[%c0_20, %c0_21] : memref<128x128xbf16, #tpu.memory_space<vmem>>, vector<128x128xbf16>
    %cst_22 = arith.constant dense<0.000000e+00> : vector<16x128xf32>
    %33 = tpu.matmul %31, %32, %cst_22 {dimension_numbers = #tpu.dot_dimension_numbers<[1], [0], [0], [1], [0, 0, 1, 1], [], []>} : vector<16x128xbf16>, vector<128x128xbf16>, vector<16x128xf32> -> vector<16x128xf32>
    %c0_23 = arith.constant 0 : index
    %c0_24 = arith.constant 0 : index
    %34 = vector.load %arg10[%c0_23, %c0_24] : memref<1x128xf32, #tpu.memory_space<vmem>>, vector<1x128xf32>
    %35 = vector.broadcast %34 : vector<1x128xf32> to vector<16x128xf32>
    %36 = arith.addf %33, %35 : vector<16x128xf32>
    %cst_25 = arith.constant 0.000000e+00 : f32
    %37 = vector.broadcast %cst_25 : f32 to vector<16x128xf32>
    %38 = arith.subf %37, %36 : vector<16x128xf32>
    %39 = math.exp %38 : vector<16x128xf32>
    %cst_26 = arith.constant 1.000000e+00 : f32
    %40 = vector.broadcast %cst_26 : f32 to vector<16x128xf32>
    %41 = arith.addf %40, %39 : vector<16x128xf32>
    %42 = tpu.reciprocal %41 {approx = true} : vector<16x128xf32> -> vector<16x128xf32>
    %43 = arith.truncf %42 : vector<16x128xf32> to vector<16x128xbf16>
    %c0_27 = arith.constant 0 : index
    %c0_28 = arith.constant 0 : index
    %44 = vector.load %arg11[%c0_27, %c0_28] : memref<16x128xbf16, #tpu.memory_space<vmem>>, vector<16x128xbf16>
    tpu.vector_store %arg11[%c0_27, %c0_28], %43 {strides = array<i32>} : memref<16x128xbf16, #tpu.memory_space<vmem>>, vector<16x128xbf16>,
    %c0_29 = arith.constant 0 : index
    %c0_30 = arith.constant 0 : index
    %45 = vector.load %arg12[%c0_29, %c0_30] : memref<16x256xf32, #tpu.memory_space<vmem>>, vector<16x256xf32>
    tpu.vector_store %arg12[%c0_29, %c0_30], %13 {strides = array<i32>} : memref<16x256xf32, #tpu.memory_space<vmem>>, vector<16x256xf32>,
    return
  }
  func.func @transform_0(%arg0: i32) -> (i32, i32) {
    %c0_i32 = arith.constant 0 : i32
    %c0_i32_0 = arith.constant 0 : i32
    return %arg0, %c0_i32 : i32, i32
  }
  func.func @transform_1(%arg0: i32) -> (i32, i32) {
    %c0_i32 = arith.constant 0 : i32
    %c0_i32_0 = arith.constant 0 : i32
    return %arg0, %c0_i32 : i32, i32
  }
  func.func @transform_2(%arg0: i32) -> (i32, i32) {
    %c0_i32 = arith.constant 0 : i32
    %c0_i32_0 = arith.constant 0 : i32
    %c0_i32_1 = arith.constant 0 : i32
    return %c0_i32, %c0_i32_0 : i32, i32
  }
  func.func @transform_3(%arg0: i32) -> (i32, i32) {
    %c0_i32 = arith.constant 0 : i32
    %c0_i32_0 = arith.constant 0 : i32
    %c0_i32_1 = arith.constant 0 : i32
    return %c0_i32, %c0_i32_0 : i32, i32
  }
  func.func @transform_4(%arg0: i32) -> (i32, i32) {
    %c0_i32 = arith.constant 0 : i32
    %c0_i32_0 = arith.constant 0 : i32
    %c0_i32_1 = arith.constant 0 : i32
    return %c0_i32, %c0_i32_0 : i32, i32
  }
  func.func @transform_5(%arg0: i32) -> (i32, i32) {
    %c0_i32 = arith.constant 0 : i32
    %c0_i32_0 = arith.constant 0 : i32
    %c0_i32_1 = arith.constant 0 : i32
    return %c0_i32, %c0_i32_0 : i32, i32
  }
  func.func @transform_6(%arg0: i32) -> (i32, i32) {
    %c0_i32 = arith.constant 0 : i32
    %c0_i32_0 = arith.constant 0 : i32
    %c0_i32_1 = arith.constant 0 : i32
    return %c0_i32, %c0_i32_0 : i32, i32
  }
  func.func @transform_7(%arg0: i32) -> (i32, i32) {
    %c0_i32 = arith.constant 0 : i32
    %c0_i32_0 = arith.constant 0 : i32
    %c0_i32_1 = arith.constant 0 : i32
    return %c0_i32, %c0_i32_0 : i32, i32
  }
  func.func @transform_8(%arg0: i32) -> (i32, i32) {
    %c0_i32 = arith.constant 0 : i32
    %c0_i32_0 = arith.constant 0 : i32
    %c0_i32_1 = arith.constant 0 : i32
    return %c0_i32, %c0_i32_0 : i32, i32
  }
  func.func @transform_9(%arg0: i32) -> (i32, i32) {
    %c0_i32 = arith.constant 0 : i32
    %c0_i32_0 = arith.constant 0 : i32
    %c0_i32_1 = arith.constant 0 : i32
    return %c0_i32, %c0_i32_0 : i32, i32
  }
  func.func @transform_10(%arg0: i32) -> (i32, i32) {
    %c0_i32 = arith.constant 0 : i32
    %c0_i32_0 = arith.constant 0 : i32
    return %arg0, %c0_i32 : i32, i32
  }
  func.func @transform_11(%arg0: i32) -> (i32, i32) {
    %c0_i32 = arith.constant 0 : i32
    %c0_i32_0 = arith.constant 0 : i32
    return %arg0, %c0_i32 : i32, i32
  }
}

module attributes {stable_mosaic.version = 11 : i64} {
  func.func @vae_kernel(%arg0: i32, %arg1: memref<16x128xbf16, #tpu.memory_space<vmem>>, %arg2: memref<16x128xbf16, #tpu.memory_space<vmem>>, %arg3: memref<128x128xbf16, #tpu.memory_space<vmem>>, %arg4: memref<1x128xf32, #tpu.memory_space<vmem>>, %arg5: memref<128x256xbf16, #tpu.memory_space<vmem>>, %arg6: memref<1x256xf32, #tpu.memory_space<vmem>>, %arg7: memref<128x128xbf16, #tpu.memory_space<vmem>>, %arg8: memref<1x128xf32, #tpu.memory_space<vmem>>, %arg9: memref<128x128xbf16, #tpu.memory_space<vmem>>, %arg10: memref<1x128xf32, #tpu.memory_space<vmem>>, %arg11: memref<16x128xbf16, #tpu.memory_space<vmem>>, %arg12: memref<16x256xf32, #tpu.memory_space<vmem>>) attributes {dimension_semantics = [#tpu.dimension_semantics<parallel>], iteration_bounds = array<i64: 1>, scalar_prefetch = 0 : i64, scratch_operands = 0 : i64, tpu.core_type = #tpu.core_type<tc>, window_params = [{transform_indices = @transform_0, window_bounds = array<i64: 16, 128>}, {transform_indices = @transform_1, window_bounds = array<i64: 16, 128>}, {pipeline_mode = #tpu.pipeline_mode<synchronous>, transform_indices = @transform_2, window_bounds = array<i64: 128, 128>}, {pipeline_mode = #tpu.pipeline_mode<synchronous>, transform_indices = @transform_3, window_bounds = array<i64: 1, 128>}, {pipeline_mode = #tpu.pipeline_mode<synchronous>, transform_indices = @transform_4, window_bounds = array<i64: 128, 256>}, {pipeline_mode = #tpu.pipeline_mode<synchronous>, transform_indices = @transform_5, window_bounds = array<i64: 1, 256>}, {pipeline_mode = #tpu.pipeline_mode<synchronous>, transform_indices = @transform_6, window_bounds = array<i64: 128, 128>}, {pipeline_mode = #tpu.pipeline_mode<synchronous>, transform_indices = @transform_7, window_bounds = array<i64: 1, 128>}, {pipeline_mode = #tpu.pipeline_mode<synchronous>, transform_indices = @transform_8, window_bounds = array<i64: 128, 128>}, {pipeline_mode = #tpu.pipeline_mode<synchronous>, transform_indices = @transform_9, window_bounds = array<i64: 1, 128>}, {transform_indices = @transform_10, window_bounds = array<i64: 16, 128>}, {transform_indices = @transform_11, window_bounds = array<i64: 16, 256>}]} {
    %c0 = arith.constant 0 : index
    %c0_0 = arith.constant 0 : index
    %0 = vector.load %arg1[%c0, %c0_0] : memref<16x128xbf16, #tpu.memory_space<vmem>>, vector<16x128xbf16>
    %c0_1 = arith.constant 0 : index
    %c0_2 = arith.constant 0 : index
    %1 = vector.load %arg3[%c0_1, %c0_2] : memref<128x128xbf16, #tpu.memory_space<vmem>>, vector<128x128xbf16>
    %cst = arith.constant dense<0.000000e+00> : vector<16x128xf32>
    %2 = tpu.matmul %0, %1, %cst {dimension_numbers = #tpu.dot_dimension_numbers<[1], [0], [0], [1], [0, 0, 1, 1], [], []>} : vector<16x128xbf16>, vector<128x128xbf16>, vector<16x128xf32> -> vector<16x128xf32>
    %c0_3 = arith.constant 0 : index
    %c0_4 = arith.constant 0 : index
    %3 = vector.load %arg4[%c0_3, %c0_4] : memref<1x128xf32, #tpu.memory_space<vmem>>, vector<1x128xf32>
    %4 = vector.broadcast %3 : vector<1x128xf32> to vector<16x128xf32>
    %5 = arith.addf %2, %4 : vector<16x128xf32>
    %cst_5 = arith.constant 0.000000e+00 : f32
    %6 = vector.broadcast %cst_5 : f32 to vector<16x128xf32>
    %7 = arith.maximumf %5, %6 : vector<16x128xf32>
    %8 = arith.truncf %7 : vector<16x128xf32> to vector<16x128xbf16>
    %c0_6 = arith.constant 0 : index
    %c0_7 = arith.constant 0 : index
    %9 = vector.load %arg5[%c0_6, %c0_7] : memref<128x256xbf16, #tpu.memory_space<vmem>>, vector<128x256xbf16>
    %cst_8 = arith.constant dense<0.000000e+00> : vector<16x256xf32>
    %10 = tpu.matmul %8, %9, %cst_8 {dimension_numbers = #tpu.dot_dimension_numbers<[1], [0], [0], [1], [0, 0, 1, 1], [], []>} : vector<16x128xbf16>, vector<128x256xbf16>, vector<16x256xf32> -> vector<16x256xf32>
    %c0_9 = arith.constant 0 : index
    %c0_10 = arith.constant 0 : index
    %11 = vector.load %arg6[%c0_9, %c0_10] : memref<1x256xf32, #tpu.memory_space<vmem>>, vector<1x256xf32>
    %12 = vector.broadcast %11 : vector<1x256xf32> to vector<16x256xf32>
    %13 = arith.addf %10, %12 : vector<16x256xf32>
    %14 = vector.extract_strided_slice %13 {offsets = [0, 0], sizes = [16, 128], strides = [1, 1]} : vector<16x256xf32> to vector<16x128xf32>
    %15 = vector.extract_strided_slice %13 {offsets = [0, 128], sizes = [16, 128], strides = [1, 1]} : vector<16x256xf32> to vector<16x128xf32>
    %cst_11 = arith.constant 5.000000e-01 : f32
    %16 = vector.broadcast %cst_11 : f32 to vector<16x128xf32>
    %17 = arith.mulf %16, %15 : vector<16x128xf32>
    %18 = math.exp %17 : vector<16x128xf32>
    %c0_12 = arith.constant 0 : index
    %c0_13 = arith.constant 0 : index
    %19 = vector.load %arg2[%c0_12, %c0_13] : memref<16x128xbf16, #tpu.memory_space<vmem>>, vector<16x128xbf16>
    %20 = arith.extf %19 : vector<16x128xbf16> to vector<16x128xf32>
    %21 = arith.mulf %18, %20 : vector<16x128xf32>
    %22 = arith.addf %14, %21 : vector<16x128xf32>
    %23 = arith.truncf %22 : vector<16x128xf32> to vector<16x128xbf16>
    %c0_14 = arith.constant 0 : index
    %c0_15 = arith.constant 0 : index
    %24 = vector.load %arg7[%c0_14, %c0_15] : memref<128x128xbf16, #tpu.memory_space<vmem>>, vector<128x128xbf16>
    %cst_16 = arith.constant dense<0.000000e+00> : vector<16x128xf32>
    %25 = tpu.matmul %23, %24, %cst_16 {dimension_numbers = #tpu.dot_dimension_numbers<[1], [0], [0], [1], [0, 0, 1, 1], [], []>} : vector<16x128xbf16>, vector<128x128xbf16>, vector<16x128xf32> -> vector<16x128xf32>
    %c0_17 = arith.constant 0 : index
    %c0_18 = arith.constant 0 : index
    %26 = vector.load %arg8[%c0_17, %c0_18] : memref<1x128xf32, #tpu.memory_space<vmem>>, vector<1x128xf32>
    %27 = vector.broadcast %26 : vector<1x128xf32> to vector<16x128xf32>
    %28 = arith.addf %25, %27 : vector<16x128xf32>
    %cst_19 = arith.constant 0.000000e+00 : f32
    %29 = vector.broadcast %cst_19 : f32 to vector<16x128xf32>
    %30 = arith.maximumf %28, %29 : vector<16x128xf32>
    %31 = arith.truncf %30 : vector<16x128xf32> to vector<16x128xbf16>
    %c0_20 = arith.constant 0 : index
    %c0_21 = arith.constant 0 : index
    %32 = vector.load %arg9[%c0_20, %c0_21] : memref<128x128xbf16, #tpu.memory_space<vmem>>, vector<128x128xbf16>
    %cst_22 = arith.constant dense<0.000000e+00> : vector<16x128xf32>
    %33 = tpu.matmul %31, %32, %cst_22 {dimension_numbers = #tpu.dot_dimension_numbers<[1], [0], [0], [1], [0, 0, 1, 1], [], []>} : vector<16x128xbf16>, vector<128x128xbf16>, vector<16x128xf32> -> vector<16x128xf32>
    %c0_23 = arith.constant 0 : index
    %c0_24 = arith.constant 0 : index
    %34 = vector.load %arg10[%c0_23, %c0_24] : memref<1x128xf32, #tpu.memory_space<vmem>>, vector<1x128xf32>
    %35 = vector.broadcast %34 : vector<1x128xf32> to vector<16x128xf32>
    %36 = arith.addf %33, %35 : vector<16x128xf32>
    %cst_25 = arith.constant 0.000000e+00 : f32
    %37 = vector.broadcast %cst_25 : f32 to vector<16x128xf32>
    %38 = arith.subf %37, %36 : vector<16x128xf32>
    %39 = math.exp %38 : vector<16x128xf32>
    %cst_26 = arith.constant 1.000000e+00 : f32
    %40 = vector.broadcast %cst_26 : f32 to vector<16x128xf32>
    %41 = arith.addf %40, %39 : vector<16x128xf32>
    %42 = tpu.reciprocal %41 {approx = true} : vector<16x128xf32> -> vector<16x128xf32>
    %43 = arith.truncf %42 : vector<16x128xf32> to vector<16x128xbf16>
    %c0_27 = arith.constant 0 : index
    %c0_28 = arith.constant 0 : index
    %44 = vector.load %arg11[%c0_27, %c0_28] : memref<16x128xbf16, #tpu.memory_space<vmem>>, vector<16x128xbf16>
    tpu.vector_store %arg11[%c0_27, %c0_28], %43 {strides = array<i32>} : memref<16x128xbf16, #tpu.memory_space<vmem>>, vector<16x128xbf16>,
    %c0_29 = arith.constant 0 : index
    %c0_30 = arith.constant 0 : index
    %45 = vector.load %arg12[%c0_29, %c0_30] : memref<16x256xf32, #tpu.memory_space<vmem>>, vector<16x256xf32>
    tpu.vector_store %arg12[%c0_29, %c0_30], %13 {strides = array<i32>} : memref<16x256xf32, #tpu.memory_space<vmem>>, vector<16x256xf32>,
    return
  }
  func.func @transform_0(%arg0: i32) -> (i32, i32) {
    %c0_i32 = arith.constant 0 : i32
    %c0_i32_0 = arith.constant 0 : i32
    return %arg0, %c0_i32 : i32, i32
  }
  func.func @transform_1(%arg0: i32) -> (i32, i32) {
    %c0_i32 = arith.constant 0 : i32
    %c0_i32_0 = arith.constant 0 : i32
    return %arg0, %c0_i32 : i32, i32
  }
  func.func @transform_2(%arg0: i32) -> (i32, i32) {
    %c0_i32 = arith.constant 0 : i32
    %c0_i32_0 = arith.constant 0 : i32
    %c0_i32_1 = arith.constant 0 : i32
    return %c0_i32, %c0_i32_0 : i32, i32
  }
  func.func @transform_3(%arg0: i32) -> (i32, i32) {
    %c0_i32 = arith.constant 0 : i32
    %c0_i32_0 = arith.constant 0 : i32
    %c0_i32_1 = arith.constant 0 : i32
    return %c0_i32, %c0_i32_0 : i32, i32
  }
  func.func @transform_4(%arg0: i32) -> (i32, i32) {
    %c0_i32 = arith.constant 0 : i32
    %c0_i32_0 = arith.constant 0 : i32
    %c0_i32_1 = arith.constant 0 : i32
    return %c0_i32, %c0_i32_0 : i32, i32
  }
  func.func @transform_5(%arg0: i32) -> (i32, i32) {
    %c0_i32 = arith.constant 0 : i32
    %c0_i32_0 = arith.constant 0 : i32
    %c0_i32_1 = arith.constant 0 : i32
    return %c0_i32, %c0_i32_0 : i32, i32
  }
  func.func @transform_6(%arg0: i32) -> (i32, i32) {
    %c0_i32 = arith.constant 0 : i32
    %c0_i32_0 = arith.constant 0 : i32
    %c0_i32_1 = arith.constant 0 : i32
    return %c0_i32, %c0_i32_0 : i32, i32
  }
  func.func @transform_7(%arg0: i32) -> (i32, i32) {
    %c0_i32 = arith.constant 0 : i32
    %c0_i32_0 = arith.constant 0 : i32
    %c0_i32_1 = arith.constant 0 : i32
    return %c0_i32, %c0_i32_0 : i32, i32
  }
  func.func @transform_8(%arg0: i32) -> (i32, i32) {
    %c0_i32 = arith.constant 0 : i32
    %c0_i32_0 = arith.constant 0 : i32
    %c0_i32_1 = arith.constant 0 : i32
    return %c0_i32, %c0_i32_0 : i32, i32
  }
  func.func @transform_9(%arg0: i32) -> (i32, i32) {
    %c0_i32 = arith.constant 0 : i32
    %c0_i32_0 = arith.constant 0 : i32
    %c0_i32_1 = arith.constant 0 : i32
    return %c0_i32, %c0_i32_0 : i32, i32
  }
  func.func @transform_10(%arg0: i32) -> (i32, i32) {
    %c0_i32 = arith.constant 0 : i32
    %c0_i32_0 = arith.constant 0 : i32
    return %arg0, %c0_i32 : i32, i32
  }
  func.func @transform_11(%arg0: i32) -> (i32, i32) {
    %c0_i32 = arith.constant 0 : i32
    %c0_i32_0 = arith.constant 0 : i32
    return %arg0, %c0_i32 : i32, i32
  }
}

</mosaic_0001>

<llo_original>
// kernel: tpu_custom_call.1
$region0: #{tpu_custom_call.1}
  #allocation0 [shape = 'u32[]', space=smem, size = 0x4, offset = 0x4, fixed_abs, tag = 'smem constant byte address 0x4 - core index']
  #allocation1 [shape = 'u32[144,128]{1,0:T(1,128)}', space=vmem, size = 0x12000, scoped, tag = 'internal scratch']
  %s0 = inlined_call_operand.hbm [shape: bf16[16,128], index: 0, kind: input, shape index: {}]
  %s1 = inlined_call_operand.hbm [shape: bf16[16,128], index: 1, kind: input, shape index: {}]
  %s2 = inlined_call_operand.hbm [shape: bf16[128,128], index: 2, kind: input, shape index: {}]
  %s3 = inlined_call_operand.vmem [shape: f32[1,128], index: 3, kind: input, shape index: {}]
  %s4 = inlined_call_operand.hbm [shape: bf16[128,256], index: 4, kind: input, shape index: {}]
  %s5 = inlined_call_operand.vmem [shape: f32[1,256], index: 5, kind: input, shape index: {}]
  %s6 = inlined_call_operand.hbm [shape: bf16[128,128], index: 6, kind: input, shape index: {}]
  %s7 = inlined_call_operand.vmem [shape: f32[1,128], index: 7, kind: input, shape index: {}]
  %s8 = inlined_call_operand.hbm [shape: bf16[128,128], index: 8, kind: input, shape index: {}]
  %s9 = inlined_call_operand.vmem [shape: f32[1,128], index: 9, kind: input, shape index: {}]
  %s10 = inlined_call_operand.hbm [shape: bf16[16,128], index: 10, kind: output, shape index: {0}]
  %s11 = inlined_call_operand.hbm [shape: f32[16,256], index: 11, kind: output, shape index: {1}]
  %12 = xla_tuple %s10, %s11
  %s13 = sld [smem:[#allocation0]]
  $region82: #{tpu_custom_call.1} parent=0
    _
  %s15 = ssub.s32 1, %s13
  %s16 = scalar_select 0, %s15, %s13
  $region1: #{tpu_custom_call.1} parent=0
    #allocation2 [shape = 'u8[4096]{0}', space=vmem, size = 0x1000, scoped, tag = 'input window, operand 0, single buffered']
    #allocation3 [shape = 's32[1]{0}', space=sflag, size = 0x4, scoped, tag = 'scoped memory for tpu_custom_call.1']
    #allocation4 [shape = 's32[1]{0}', space=sflag, size = 0x4, scoped, tag = 'scoped memory for tpu_custom_call.1']
    #allocation5 [shape = 'u8[4096]{0}', space=vmem, size = 0x1000, scoped, tag = 'input window, operand 1, single buffered']
    #allocation6 [shape = 's32[1]{0}', space=sflag, size = 0x4, scoped, tag = 'scoped memory for tpu_custom_call.1']
    #allocation7 [shape = 'u8[32768]{0}', space=vmem, size = 0x8000, scoped, tag = 'input window, operand 2, single buffered']
    #allocation8 [shape = 'u8[65536]{0}', space=vmem, size = 0x10000, scoped, tag = 'input window, operand 4, single buffered']
    #allocation9 [shape = 's32[1]{0}', space=sflag, size = 0x4, scoped, tag = 'scoped memory for tpu_custom_call.1']
    #allocation10 [shape = 'u8[32768]{0}', space=vmem, size = 0x8000, scoped, tag = 'input window, operand 6, single buffered']
    #allocation11 [shape = 'u8[32768]{0}', space=vmem, size = 0x8000, scoped, tag = 'input window, operand 8, single buffered']
    #allocation12 [shape = 's32[1]{0}', space=sflag, size = 0x4, scoped, tag = 'scoped memory for tpu_custom_call.1']
    #allocation13 [shape = 'u8[4096]{0}', space=vmem, size = 0x1000, scoped, tag = 'output window, operand 0, single buffered']
    #allocation14 [shape = 'u8[16384]{0}', space=vmem, size = 0x4000, scoped, tag = 'output window, operand 1, single buffered']
    #allocation15 [shape = 's32[1]{0}', space=sflag, size = 0x4, scoped, tag = 'scoped memory for tpu_custom_call.1']
    %17 = vsyncpa [#allocation3], 0
    %18 = vsyncpa [#allocation6], 0
    %19 = vsyncpa [#allocation9], 0
    %20 = vsyncpa [#allocation12], 0
    %21 = vsyncpa [#allocation4], 0
    %22 = vsyncpa [#allocation15], 0
    // Predicated region
    $region2: #{tpu_custom_call.1} parent=1 // pred_check
      _
    $region3: #{tpu_custom_call.1} parent=1 // pred_check_branch
      %24 = sbr.rel (0) target = $region5
    $region4: #{tpu_custom_call.1} parent=1 // pred_region
      %s26 = ssub.s32 128, 128
      %27 = vsyncadd [#allocation3], %s26
      %s28 = sshll.u32 [#allocation2], 4
      %s29 = int_to_ptr.vmem [resolvable:$true] %s28
      %34 = dma.hbm_to_vmem [thread:$0]  %s0, 128, %s29, [#allocation3], 64, 64, 4
    $region5: #{tpu_custom_call.1} parent=1 // pred_fallthru
      _
    // Predicated region
    $region6: #{tpu_custom_call.1} parent=1 // pred_check
      _
    $region7: #{tpu_custom_call.1} parent=1 // pred_check_branch
      %36 = sbr.rel (0) target = $region9
    $region8: #{tpu_custom_call.1} parent=1 // pred_region
      %s38 = ssub.s32 128, 128
      %39 = vsyncadd [#allocation6], %s38
      %s40 = sshll.u32 [#allocation5], 4
      %s41 = int_to_ptr.vmem [resolvable:$true] %s40
      %46 = dma.hbm_to_vmem [thread:$0]  %s1, 128, %s41, [#allocation6], 64, 64, 4
    $region9: #{tpu_custom_call.1} parent=1 // pred_fallthru
      _
    // Predicated region
    $region10: #{tpu_custom_call.1} parent=1 // pred_check
      _
    $region11: #{tpu_custom_call.1} parent=1 // pred_check_branch
      %48 = sbr.rel (0) target = $region13
    $region12: #{tpu_custom_call.1} parent=1 // pred_region
      %s50 = ssub.s32 1024, 1024
      %51 = vsyncadd [#allocation6], %s50
      %s52 = sshll.u32 [#allocation7], 4
      %s53 = int_to_ptr.vmem [resolvable:$true] %s52
      %58 = dma.hbm_to_vmem [thread:$0]  %s2, 1024, %s53, [#allocation6], 64, 64, 4
    $region13: #{tpu_custom_call.1} parent=1 // pred_fallthru
      _
    // Predicated region
    $region14: #{tpu_custom_call.1} parent=1 // pred_check
      _
    $region15: #{tpu_custom_call.1} parent=1 // pred_check_branch
      %60 = sbr.rel (0) target = $region17
    $region16: #{tpu_custom_call.1} parent=1 // pred_region
      _
    $region17: #{tpu_custom_call.1} parent=1 // pred_fallthru
      _
    // Predicated region
    $region18: #{tpu_custom_call.1} parent=1 // pred_check
      _
    $region19: #{tpu_custom_call.1} parent=1 // pred_check_branch
      %62 = sbr.rel (0) target = $region21
    $region20: #{tpu_custom_call.1} parent=1 // pred_region
      %s64 = ssub.s32 2048, 2048
      %65 = vsyncadd [#allocation9], %s64
      %s66 = sshll.u32 [#allocation8], 4
      %s67 = int_to_ptr.vmem [resolvable:$true] %s66
      %72 = dma.hbm_to_vmem [thread:$0]  %s4, 2048, %s67, [#allocation9], 128, 128, 8
    $region21: #{tpu_custom_call.1} parent=1 // pred_fallthru
      _
    // Predicated region
    $region22: #{tpu_custom_call.1} parent=1 // pred_check
      _
    $region23: #{tpu_custom_call.1} parent=1 // pred_check_branch
      %74 = sbr.rel (0) target = $region25
    $region24: #{tpu_custom_call.1} parent=1 // pred_region
      _
    $region25: #{tpu_custom_call.1} parent=1 // pred_fallthru
      _
    // Predicated region
    $region26: #{tpu_custom_call.1} parent=1 // pred_check
      _
    $region27: #{tpu_custom_call.1} parent=1 // pred_check_branch
      %76 = sbr.rel (0) target = $region29
    $region28: #{tpu_custom_call.1} parent=1 // pred_region
      %s78 = ssub.s32 1024, 1024
      %79 = vsyncadd [#allocation9], %s78
      %s80 = sshll.u32 [#allocation10], 4
      %s81 = int_to_ptr.vmem [resolvable:$true] %s80
      %86 = dma.hbm_to_vmem [thread:$0]  %s6, 1024, %s81, [#allocation9], 64, 64, 4
    $region29: #{tpu_custom_call.1} parent=1 // pred_fallthru
      _
    // Predicated region
    $region30: #{tpu_custom_call.1} parent=1 // pred_check
      _
    $region31: #{tpu_custom_call.1} parent=1 // pred_check_branch
      %88 = sbr.rel (0) target = $region33
    $region32: #{tpu_custom_call.1} parent=1 // pred_region
      _
    $region33: #{tpu_custom_call.1} parent=1 // pred_fallthru
      _
    // Predicated region
    $region34: #{tpu_custom_call.1} parent=1 // pred_check
      _
    $region35: #{tpu_custom_call.1} parent=1 // pred_check_branch
      %90 = sbr.rel (0) target = $region37
    $region36: #{tpu_custom_call.1} parent=1 // pred_region
      %s92 = ssub.s32 1024, 1024
      %93 = vsyncadd [#allocation12], %s92
      %s94 = sshll.u32 [#allocation11], 4
      %s95 = int_to_ptr.vmem [resolvable:$true] %s94
      %100 = dma.hbm_to_vmem [thread:$0]  %s8, 1024, %s95, [#allocation12], 64, 64, 4
    $region37: #{tpu_custom_call.1} parent=1 // pred_fallthru
      _
    // Predicated region
    $region38: #{tpu_custom_call.1} parent=1 // pred_check
      _
    $region39: #{tpu_custom_call.1} parent=1 // pred_check_branch
      %102 = sbr.rel (0) target = $region41
    $region40: #{tpu_custom_call.1} parent=1 // pred_region
      _
    $region41: #{tpu_custom_call.1} parent=1 // pred_fallthru
      _
    // Predicated region
    $region42: #{tpu_custom_call.1} parent=1 // pred_check
      _
    $region43: #{tpu_custom_call.1} parent=1 // pred_check_branch
      %104 = sbr.rel (0) target = $region45
    $region44: #{tpu_custom_call.1} parent=1 // pred_region
      %105 = dma.done [#allocation3], 128
    $region45: #{tpu_custom_call.1} parent=1 // pred_fallthru
      _
    // Predicated region
    $region46: #{tpu_custom_call.1} parent=1 // pred_check
      _
    $region47: #{tpu_custom_call.1} parent=1 // pred_check_branch
      %107 = sbr.rel (0) target = $region49
    $region48: #{tpu_custom_call.1} parent=1 // pred_region
      %108 = dma.done [#allocation6], 128
    $region49: #{tpu_custom_call.1} parent=1 // pred_fallthru
      _
    // Predicated region
    $region50: #{tpu_custom_call.1} parent=1 // pred_check
      _
    $region51: #{tpu_custom_call.1} parent=1 // pred_check_branch
      %110 = sbr.rel (0) target = $region53
    $region52: #{tpu_custom_call.1} parent=1 // pred_region
      %111 = dma.done [#allocation6], 1024
    $region53: #{tpu_custom_call.1} parent=1 // pred_fallthru
      _
    // Predicated region
    $region54: #{tpu_custom_call.1} parent=1 // pred_check
      _
    $region55: #{tpu_custom_call.1} parent=1 // pred_check_branch
      %113 = sbr.rel (0) target = $region57
    $region56: #{tpu_custom_call.1} parent=1 // pred_region
      %114 = dma.done [#allocation9], 2048
    $region57: #{tpu_custom_call.1} parent=1 // pred_fallthru
      _
    // Predicated region
    $region58: #{tpu_custom_call.1} parent=1 // pred_check
      _
    $region59: #{tpu_custom_call.1} parent=1 // pred_check_branch
      %116 = sbr.rel (0) target = $region61
    $region60: #{tpu_custom_call.1} parent=1 // pred_region
      %117 = dma.done [#allocation9], 1024
    $region61: #{tpu_custom_call.1} parent=1 // pred_fallthru
      _
    // Predicated region
    $region62: #{tpu_custom_call.1} parent=1 // pred_check
      _
    $region63: #{tpu_custom_call.1} parent=1 // pred_check_branch
      %119 = sbr.rel (0) target = $region65
    $region64: #{tpu_custom_call.1} parent=1 // pred_region
      %120 = dma.done [#allocation12], 1024
    $region65: #{tpu_custom_call.1} parent=1 // pred_fallthru
      _
    %v122 = vld [vmem:[#allocation2] sm:$0xf]
    %v123 = vld [vmem:[#allocation2 + $0x4] sm:$0xf]
    %v124 = vld [vmem:[#allocation7] sm:$0xf]
    %v125 = vld [vmem:[#allocation7 + $0x4] sm:$0xf]
    %v126 = vld [vmem:[#allocation7 + $0x8] sm:$0xf]
    %v127 = vld [vmem:[#allocation7 + $0xc] sm:$0xf]
    %v128 = vld [vmem:[#allocation7 + $0x10] sm:$0xf]
    %v129 = vld [vmem:[#allocation7 + $0x14] sm:$0xf]
    %v130 = vld [vmem:[#allocation7 + $0x18] sm:$0xf]
    %v131 = vld [vmem:[#allocation7 + $0x1c] sm:$0xf]
    %v132 = vld [vmem:[#allocation7 + $0x20] sm:$0xf]
    %v133 = vld [vmem:[#allocation7 + $0x24] sm:$0xf]
    %v134 = vld [vmem:[#allocation7 + $0x28] sm:$0xf]
    %v135 = vld [vmem:[#allocation7 + $0x2c] sm:$0xf]
    %v136 = vld [vmem:[#allocation7 + $0x30] sm:$0xf]
    %v137 = vld [vmem:[#allocation7 + $0x34] sm:$0xf]
    %v138 = vld [vmem:[#allocation7 + $0x38] sm:$0xf]
    %v139 = vld [vmem:[#allocation7 + $0x3c] sm:$0xf]
    %v140 = vld [vmem:[%s3] sm:$0x1]
    %v142 = vlaneseq
    %v143 = vshrl.u32 %v142, 7
    %v144 = vsub.s32 0, %v143
    %v145 = vrot.slane %v140, %v144
    %v149 = vunpack.c.l.b16 %v122
    %v150 = vunpack.c.l.b16 %v123
    %v151 = vpack.c.b16 %v150, %v149
    %v169 = vunpack.c.l.b16 %v124
    %v170 = vunpack.c.l.b16 %v125
    %v171 = vunpack.c.l.b16 %v126
    %v172 = vunpack.c.l.b16 %v127
    %v173 = vunpack.c.l.b16 %v128
    %v174 = vunpack.c.l.b16 %v129
    %v175 = vunpack.c.l.b16 %v130
    %v176 = vunpack.c.l.b16 %v131
    %v177 = vunpack.c.l.b16 %v132
    %v178 = vunpack.c.l.b16 %v133
    %v179 = vunpack.c.l.b16 %v134
    %v180 = vunpack.c.l.b16 %v135
    %v181 = vunpack.c.l.b16 %v136
    %v182 = vunpack.c.l.b16 %v137
    %v183 = vunpack.c.l.b16 %v138
    %v184 = vunpack.c.l.b16 %v139
    %v185 = vpack.c.b16 %v170, %v169
    %v186 = vpack.c.b16 %v172, %v171
    %v187 = vpack.c.b16 %v174, %v173
    %v188 = vpack.c.b16 %v176, %v175
    %v189 = vpack.c.b16 %v178, %v177
    %v190 = vpack.c.b16 %v180, %v179
    %v191 = vpack.c.b16 %v182, %v181
    %v192 = vpack.c.b16 %v184, %v183
    %201 = vmatprep.subr.bf16.mxu0 0
    %202 = vmatpush1.bf16.msra.mxu0 %v192
    %203 = vmatprep.subr.bf16.mxu0 0
    %204 = vmatpush1.bf16.msra.mxu0 %v191
    %205 = vmatprep.subr.bf16.mxu0 0
    %206 = vmatpush1.bf16.msra.mxu0 %v190
    %207 = vmatprep.subr.bf16.mxu0 0
    %208 = vmatpush1.bf16.msra.mxu0 %v189
    %209 = vmatprep.subr.bf16.mxu0 0
    %210 = vmatpush1.bf16.msra.mxu0 %v188
    %211 = vmatprep.subr.bf16.mxu0 0
    %212 = vmatpush1.bf16.msra.mxu0 %v187
    %213 = vmatprep.subr.bf16.mxu0 0
    %214 = vmatpush1.bf16.msra.mxu0 %v186
    %215 = vmatprep.subr.bf16.mxu0 0
    %216 = vmatpush1.bf16.msra.mxu0 %v185
    %217 = vmatprep.subr.bf16.mxu0 0
    %218 = vmatpush2.bf16.msra.mxu0 0
    %219 = vmatprep.subr.bf16.mxu0 0
    %220 = vmatpush2.bf16.msra.mxu0 0
    %221 = vmatprep.subr.bf16.mxu0 0
    %222 = vmatpush2.bf16.msra.mxu0 0
    %223 = vmatprep.subr.bf16.mxu0 0
    %224 = vmatpush2.bf16.msra.mxu0 0
    %225 = vmatprep.subr.bf16.mxu0 0
    %226 = vmatpush2.bf16.msra.mxu0 0
    %227 = vmatprep.subr.bf16.mxu0 0
    %228 = vmatpush2.bf16.msra.mxu0 0
    %229 = vmatprep.subr.bf16.mxu0 0
    %230 = vmatpush2.bf16.msra.mxu0 0
    %231 = vmatprep.subr.bf16.mxu0 0
    %232 = vmatpush2.bf16.msra.mxu0 0
    %233 = vmatprep.mubr.bf16.mxu0 0
    %234 = vmatmul.mubr.bf16.gmra.mxu0 %v151
    %v235 = vpop.f32.mrf.mxu0
    %v236 = vadd.f32 %v145, %v235
    %v237 = vpop.f32.mrf.mxu0
    %v238 = vpop.f32.mrf.mxu0
    %v239 = vadd.f32 %v145, %v238
    %v240 = vpop.f32.mrf.mxu0
    %241 = vdwg.mxu0
    %v242 = vmax.f32 %v236, 0.0
    %v243 = vmax.f32 %v239, 0.0
    %v244 = vpack.c.bf16 %v243, %v242
    %v245 = vld [vmem:[#allocation8] sm:$0xff]
    %v246 = vld [vmem:[#allocation8 + $0x8] sm:$0xff]
    %v247 = vld [vmem:[#allocation8 + $0x10] sm:$0xff]
    %v248 = vld [vmem:[#allocation8 + $0x18] sm:$0xff]
    %v249 = vld [vmem:[#allocation8 + $0x20] sm:$0xff]
    %v250 = vld [vmem:[#allocation8 + $0x28] sm:$0xff]
    %v251 = vld [vmem:[#allocation8 + $0x30] sm:$0xff]
    %v252 = vld [vmem:[#allocation8 + $0x38] sm:$0xff]
    %v253 = vld [vmem:[#allocation8 + $0x40] sm:$0xff]
    %v254 = vld [vmem:[#allocation8 + $0x48] sm:$0xff]
    %v255 = vld [vmem:[#allocation8 + $0x50] sm:$0xff]
    %v256 = vld [vmem:[#allocation8 + $0x58] sm:$0xff]
    %v257 = vld [vmem:[#allocation8 + $0x60] sm:$0xff]
    %v258 = vld [vmem:[#allocation8 + $0x68] sm:$0xff]
    %v259 = vld [vmem:[#allocation8 + $0x70] sm:$0xff]
    %v260 = vld [vmem:[#allocation8 + $0x78] sm:$0xff]
    %v261 = vld [vmem:[%s5] sm:$0x3]
    %v263 = vlaneseq
    %v264 = vshrl.u32 %v263, 7
    %v265 = vsub.s32 0, %v264
    %v266 = vrot.slane %v261, %v265
    %v267 = vlaneseq
    %v268 = vshrl.u32 %v267, 7
    %v269 = vsub.s32 1, %v268
    %v270 = vrot.slane %v261, %v269
    %v289 = vunpack.c.l.b16 %v245
    %v290 = vunpack.c.h.b16 %v245
    %v291 = vunpack.c.l.b16 %v246
    %v292 = vunpack.c.h.b16 %v246
    %v293 = vunpack.c.l.b16 %v247
    %v294 = vunpack.c.h.b16 %v247
    %v295 = vunpack.c.l.b16 %v248
    %v296 = vunpack.c.h.b16 %v248
    %v297 = vunpack.c.l.b16 %v249
    %v298 = vunpack.c.h.b16 %v249
    %v299 = vunpack.c.l.b16 %v250
    %v300 = vunpack.c.h.b16 %v250
    %v301 = vunpack.c.l.b16 %v251
    %v302 = vunpack.c.h.b16 %v251
    %v303 = vunpack.c.l.b16 %v252
    %v304 = vunpack.c.h.b16 %v252
    %v305 = vunpack.c.l.b16 %v253
    %v306 = vunpack.c.h.b16 %v253
    %v307 = vunpack.c.l.b16 %v254
    %v308 = vunpack.c.h.b16 %v254
    %v309 = vunpack.c.l.b16 %v255
    %v310 = vunpack.c.h.b16 %v255
    %v311 = vunpack.c.l.b16 %v256
    %v312 = vunpack.c.h.b16 %v256
    %v313 = vunpack.c.l.b16 %v257
    %v314 = vunpack.c.h.b16 %v257
    %v315 = vunpack.c.l.b16 %v258
    %v316 = vunpack.c.h.b16 %v258
    %v317 = vunpack.c.l.b16 %v259
    %v318 = vunpack.c.h.b16 %v259
    %v319 = vunpack.c.l.b16 %v260
    %v320 = vunpack.c.h.b16 %v260
    %v321 = vpack.c.b16 %v291, %v289
    %v322 = vpack.c.b16 %v292, %v290
    %v323 = vpack.c.b16 %v295, %v293
    %v324 = vpack.c.b16 %v296, %v294
    %v325 = vpack.c.b16 %v299, %v297
    %v326 = vpack.c.b16 %v300, %v298
    %v327 = vpack.c.b16 %v303, %v301
    %v328 = vpack.c.b16 %v304, %v302
    %v329 = vpack.c.b16 %v307, %v305
    %v330 = vpack.c.b16 %v308, %v306
    %v331 = vpack.c.b16 %v311, %v309
    %v332 = vpack.c.b16 %v312, %v310
    %v333 = vpack.c.b16 %v315, %v313
    %v334 = vpack.c.b16 %v316, %v314
    %v335 = vpack.c.b16 %v319, %v317
    %v336 = vpack.c.b16 %v320, %v318
    %353 = vmatprep.subr.bf16.mxu0 %v336
    %354 = vmatpush1.bf16.msra.mxu0 %v335
    %355 = vmatprep.subr.bf16.mxu0 %v334
    %356 = vmatpush1.bf16.msra.mxu0 %v333
    %357 = vmatprep.subr.bf16.mxu0 %v332
    %358 = vmatpush1.bf16.msra.mxu0 %v331
    %359 = vmatprep.subr.bf16.mxu0 %v330
    %360 = vmatpush1.bf16.msra.mxu0 %v329
    %361 = vmatprep.subr.bf16.mxu0 %v328
    %362 = vmatpush1.bf16.msra.mxu0 %v327
    %363 = vmatprep.subr.bf16.mxu0 %v326
    %364 = vmatpush1.bf16.msra.mxu0 %v325
    %365 = vmatprep.subr.bf16.mxu0 %v324
    %366 = vmatpush1.bf16.msra.mxu0 %v323
    %367 = vmatprep.subr.bf16.mxu0 %v322
    %368 = vmatpush1.bf16.msra.mxu0 %v321
    %369 = vmatprep.subr.bf16.mxu0 0
    %370 = vmatpush2.bf16.msra.mxu0 0
    %371 = vmatprep.subr.bf16.mxu0 0
    %372 = vmatpush2.bf16.msra.mxu0 0
    %373 = vmatprep.subr.bf16.mxu0 0
    %374 = vmatpush2.bf16.msra.mxu0 0
    %375 = vmatprep.subr.bf16.mxu0 0
    %376 = vmatpush2.bf16.msra.mxu0 0
    %377 = vmatprep.subr.bf16.mxu0 0
    %378 = vmatpush2.bf16.msra.mxu0 0
    %379 = vmatprep.subr.bf16.mxu0 0
    %380 = vmatpush2.bf16.msra.mxu0 0
    %381 = vmatprep.subr.bf16.mxu0 0
    %382 = vmatpush2.bf16.msra.mxu0 0
    %383 = vmatprep.subr.bf16.mxu0 0
    %384 = vmatpush2.bf16.msra.mxu0 0
    %385 = vmatprep.mubr.bf16.mxu0 0
    %386 = vmatmul.mubr.bf16.gmra.mxu0 %v244
    %v387 = vpop.f32.mrf.mxu0
    %v388 = vadd.f32 %v266, %v387
    %v389 = vpop.f32.mrf.mxu0
    %v390 = vadd.f32 %v270, %v389
    %v391 = vpop.f32.mrf.mxu0
    %v392 = vadd.f32 %v266, %v391
    %v393 = vpop.f32.mrf.mxu0
    %v394 = vadd.f32 %v270, %v393
    %395 = vdwg.mxu0
    %v396 = vmul.f32 %v390, 0.5
    %v397 = vmul.f32 %v394, 0.5
    %v398 = vmul.f32 %v396, 1.442695
    %v399 = vpow.pop %v398
    %v400 = vmul.f32 %v397, 1.442695
    %v401 = vpow.pop %v400
    %v402 = vld [vmem:[#allocation5] sm:$0xf]
    %v403 = vld [vmem:[#allocation5 + $0x4] sm:$0xf]
    %v404 = vunpack.c.l.bf16 %v402
    %v405 = vunpack.c.l.bf16 %v403
    %v406 = vmul.f32 %v399, %v404
    %v407 = vmul.f32 %v401, %v405
    %v408 = vadd.f32 %v388, %v406
    %v409 = vadd.f32 %v392, %v407
    %v410 = vpack.c.bf16 %v409, %v408
    %v411 = vld [vmem:[#allocation10] sm:$0xf]
    %v412 = vld [vmem:[#allocation10 + $0x4] sm:$0xf]
    %v413 = vld [vmem:[#allocation10 + $0x8] sm:$0xf]
    %v414 = vld [vmem:[#allocation10 + $0xc] sm:$0xf]
    %v415 = vld [vmem:[#allocation10 + $0x10] sm:$0xf]
    %v416 = vld [vmem:[#allocation10 + $0x14] sm:$0xf]
    %v417 = vld [vmem:[#allocation10 + $0x18] sm:$0xf]
    %v418 = vld [vmem:[#allocation10 + $0x1c] sm:$0xf]
    %v419 = vld [vmem:[#allocation10 + $0x20] sm:$0xf]
    %v420 = vld [vmem:[#allocation10 + $0x24] sm:$0xf]
    %v421 = vld [vmem:[#allocation10 + $0x28] sm:$0xf]
    %v422 = vld [vmem:[#allocation10 + $0x2c] sm:$0xf]
    %v423 = vld [vmem:[#allocation10 + $0x30] sm:$0xf]
    %v424 = vld [vmem:[#allocation10 + $0x34] sm:$0xf]
    %v425 = vld [vmem:[#allocation10 + $0x38] sm:$0xf]
    %v426 = vld [vmem:[#allocation10 + $0x3c] sm:$0xf]
    %v427 = vld [vmem:[%s7] sm:$0x1]
    %v429 = vlaneseq
    %v430 = vshrl.u32 %v429, 7
    %v431 = vsub.s32 0, %v430
    %v432 = vrot.slane %v427, %v431
    %v450 = vunpack.c.l.b16 %v411
    %v451 = vunpack.c.l.b16 %v412
    %v452 = vunpack.c.l.b16 %v413
    %v453 = vunpack.c.l.b16 %v414
    %v454 = vunpack.c.l.b16 %v415
    %v455 = vunpack.c.l.b16 %v416
    %v456 = vunpack.c.l.b16 %v417
    %v457 = vunpack.c.l.b16 %v418
    %v458 = vunpack.c.l.b16 %v419
    %v459 = vunpack.c.l.b16 %v420
    %v460 = vunpack.c.l.b16 %v421
    %v461 = vunpack.c.l.b16 %v422
    %v462 = vunpack.c.l.b16 %v423
    %v463 = vunpack.c.l.b16 %v424
    %v464 = vunpack.c.l.b16 %v425
    %v465 = vunpack.c.l.b16 %v426
    %v466 = vpack.c.b16 %v451, %v450
    %v467 = vpack.c.b16 %v453, %v452
    %v468 = vpack.c.b16 %v455, %v454
    %v469 = vpack.c.b16 %v457, %v456
    %v470 = vpack.c.b16 %v459, %v458
    %v471 = vpack.c.b16 %v461, %v460
    %v472 = vpack.c.b16 %v463, %v462
    %v473 = vpack.c.b16 %v465, %v464
    %482 = vmatprep.subr.bf16.mxu0 0
    %483 = vmatpush1.bf16.msra.mxu0 %v473
    %484 = vmatprep.subr.bf16.mxu0 0
    %485 = vmatpush1.bf16.msra.mxu0 %v472
    %486 = vmatprep.subr.bf16.mxu0 0
    %487 = vmatpush1.bf16.msra.mxu0 %v471
    %488 = vmatprep.subr.bf16.mxu0 0
    %489 = vmatpush1.bf16.msra.mxu0 %v470
    %490 = vmatprep.subr.bf16.mxu0 0
    %491 = vmatpush1.bf16.msra.mxu0 %v469
    %492 = vmatprep.subr.bf16.mxu0 0
    %493 = vmatpush1.bf16.msra.mxu0 %v468
    %494 = vmatprep.subr.bf16.mxu0 0
    %495 = vmatpush1.bf16.msra.mxu0 %v467
    %496 = vmatprep.subr.bf16.mxu0 0
    %497 = vmatpush1.bf16.msra.mxu0 %v466
    %498 = vmatprep.subr.bf16.mxu0 0
    %499 = vmatpush2.bf16.msra.mxu0 0
    %500 = vmatprep.subr.bf16.mxu0 0
    %501 = vmatpush2.bf16.msra.mxu0 0
    %502 = vmatprep.subr.bf16.mxu0 0
    %503 = vmatpush2.bf16.msra.mxu0 0
    %504 = vmatprep.subr.bf16.mxu0 0
    %505 = vmatpush2.bf16.msra.mxu0 0
    %506 = vmatprep.subr.bf16.mxu0 0
    %507 = vmatpush2.bf16.msra.mxu0 0
    %508 = vmatprep.subr.bf16.mxu0 0
    %509 = vmatpush2.bf16.msra.mxu0 0
    %510 = vmatprep.subr.bf16.mxu0 0
    %511 = vmatpush2.bf16.msra.mxu0 0
    %512 = vmatprep.subr.bf16.mxu0 0
    %513 = vmatpush2.bf16.msra.mxu0 0
    %514 = vmatprep.mubr.bf16.mxu0 0
    %515 = vmatmul.mubr.bf16.gmra.mxu0 %v410
    %v516 = vpop.f32.mrf.mxu0
    %v517 = vadd.f32 %v432, %v516
    %v518 = vpop.f32.mrf.mxu0
    %v519 = vpop.f32.mrf.mxu0
    %v520 = vadd.f32 %v432, %v519
    %v521 = vpop.f32.mrf.mxu0
    %522 = vdwg.mxu0
    %v523 = vmax.f32 %v517, 0.0
    %v524 = vmax.f32 %v520, 0.0
    %v525 = vpack.c.bf16 %v524, %v523
    %v526 = vld [vmem:[#allocation11] sm:$0xf]
    %v527 = vld [vmem:[#allocation11 + $0x4] sm:$0xf]
    %v528 = vld [vmem:[#allocation11 + $0x8] sm:$0xf]
    %v529 = vld [vmem:[#allocation11 + $0xc] sm:$0xf]
    %v530 = vld [vmem:[#allocation11 + $0x10] sm:$0xf]
    %v531 = vld [vmem:[#allocation11 + $0x14] sm:$0xf]
    %v532 = vld [vmem:[#allocation11 + $0x18] sm:$0xf]
    %v533 = vld [vmem:[#allocation11 + $0x1c] sm:$0xf]
    %v534 = vld [vmem:[#allocation11 + $0x20] sm:$0xf]
    %v535 = vld [vmem:[#allocation11 + $0x24] sm:$0xf]
    %v536 = vld [vmem:[#allocation11 + $0x28] sm:$0xf]
    %v537 = vld [vmem:[#allocation11 + $0x2c] sm:$0xf]
    %v538 = vld [vmem:[#allocation11 + $0x30] sm:$0xf]
    %v539 = vld [vmem:[#allocation11 + $0x34] sm:$0xf]
    %v540 = vld [vmem:[#allocation11 + $0x38] sm:$0xf]
    %v541 = vld [vmem:[#allocation11 + $0x3c] sm:$0xf]
    %v542 = vld [vmem:[%s9] sm:$0x1]
    %v544 = vlaneseq
    %v545 = vshrl.u32 %v544, 7
    %v546 = vsub.s32 0, %v545
    %v547 = vrot.slane %v542, %v546
    %v565 = vunpack.c.l.b16 %v526
    %v566 = vunpack.c.l.b16 %v527
    %v567 = vunpack.c.l.b16 %v528
    %v568 = vunpack.c.l.b16 %v529
    %v569 = vunpack.c.l.b16 %v530
    %v570 = vunpack.c.l.b16 %v531
    %v571 = vunpack.c.l.b16 %v532
    %v572 = vunpack.c.l.b16 %v533
    %v573 = vunpack.c.l.b16 %v534
    %v574 = vunpack.c.l.b16 %v535
    %v575 = vunpack.c.l.b16 %v536
    %v576 = vunpack.c.l.b16 %v537
    %v577 = vunpack.c.l.b16 %v538
    %v578 = vunpack.c.l.b16 %v539
    %v579 = vunpack.c.l.b16 %v540
    %v580 = vunpack.c.l.b16 %v541
    %v581 = vpack.c.b16 %v566, %v565
    %v582 = vpack.c.b16 %v568, %v567
    %v583 = vpack.c.b16 %v570, %v569
    %v584 = vpack.c.b16 %v572, %v571
    %v585 = vpack.c.b16 %v574, %v573
    %v586 = vpack.c.b16 %v576, %v575
    %v587 = vpack.c.b16 %v578, %v577
    %v588 = vpack.c.b16 %v580, %v579
    %597 = vmatprep.subr.bf16.mxu0 0
    %598 = vmatpush1.bf16.msra.mxu0 %v588
    %599 = vmatprep.subr.bf16.mxu0 0
    %600 = vmatpush1.bf16.msra.mxu0 %v587
    %601 = vmatprep.subr.bf16.mxu0 0
    %602 = vmatpush1.bf16.msra.mxu0 %v586
    %603 = vmatprep.subr.bf16.mxu0 0
    %604 = vmatpush1.bf16.msra.mxu0 %v585
    %605 = vmatprep.subr.bf16.mxu0 0
    %606 = vmatpush1.bf16.msra.mxu0 %v584
    %607 = vmatprep.subr.bf16.mxu0 0
    %608 = vmatpush1.bf16.msra.mxu0 %v583
    %609 = vmatprep.subr.bf16.mxu0 0
    %610 = vmatpush1.bf16.msra.mxu0 %v582
    %611 = vmatprep.subr.bf16.mxu0 0
    %612 = vmatpush1.bf16.msra.mxu0 %v581
    %613 = vmatprep.subr.bf16.mxu0 0
    %614 = vmatpush2.bf16.msra.mxu0 0
    %615 = vmatprep.subr.bf16.mxu0 0
    %616 = vmatpush2.bf16.msra.mxu0 0
    %617 = vmatprep.subr.bf16.mxu0 0
    %618 = vmatpush2.bf16.msra.mxu0 0
    %619 = vmatprep.subr.bf16.mxu0 0
    %620 = vmatpush2.bf16.msra.mxu0 0
    %621 = vmatprep.subr.bf16.mxu0 0
    %622 = vmatpush2.bf16.msra.mxu0 0
    %623 = vmatprep.subr.bf16.mxu0 0
    %624 = vmatpush2.bf16.msra.mxu0 0
    %625 = vmatprep.subr.bf16.mxu0 0
    %626 = vmatpush2.bf16.msra.mxu0 0
    %627 = vmatprep.subr.bf16.mxu0 0
    %628 = vmatpush2.bf16.msra.mxu0 0
    %629 = vmatprep.mubr.bf16.mxu0 0
    %630 = vmatmul.mubr.bf16.gmra.mxu0 %v525
    %v631 = vpop.f32.mrf.mxu0
    %v632 = vadd.f32 %v547, %v631
    %v633 = vpop.f32.mrf.mxu0
    %v634 = vpop.f32.mrf.mxu0
    %v635 = vadd.f32 %v547, %v634
    %v636 = vpop.f32.mrf.mxu0
    %637 = vdwg.mxu0
    %v638 = vsub.f32 0.0, %v632
    %v639 = vsub.f32 0.0, %v635
    %v640 = vmul.f32 %v638, 1.442695
    %v641 = vpow.pop %v640
    %v642 = vmul.f32 %v639, 1.442695
    %v643 = vpow.pop %v642
    %v644 = vadd.f32 %v641, 1.0
    %v645 = vadd.f32 %v643, 1.0
    %v646 = vrcp.pop %v644
    %v647 = vrcp.pop %v645
    %v648 = vpack.c.bf16 %v647, %v646
    %v650 = vunpack.c.l.b16 %v648
    %v651 = vunpack.c.h.b16 %v648
    %v652 = vpack.c.b16 %v650, %v650
    %v653 = vpack.c.b16 %v651, %v651
    %656 = vst [vmem:[#allocation13] sm:$0xf] %v652
    %657 = vst [vmem:[#allocation13 + $0x4] sm:$0xf] %v653
    %658 = vst [vmem:[#allocation14] sm:$0xff] %v388
    %659 = vst [vmem:[#allocation14 + $0x8] sm:$0xff] %v390
    %660 = vst [vmem:[#allocation14 + $0x10] sm:$0xff] %v392
    %661 = vst [vmem:[#allocation14 + $0x18] sm:$0xff] %v394
    // Predicated region
    $region66: #{tpu_custom_call.1} parent=1 // pred_check
      _
    $region67: #{tpu_custom_call.1} parent=1 // pred_check_branch
      %663 = sbr.rel (0) target = $region69
    $region68: #{tpu_custom_call.1} parent=1 // pred_region
      %s665 = ssub.s32 128, 128
      %666 = vsyncadd [#allocation4], %s665
      %s667 = sshll.u32 [#allocation13], 4
      %s668 = int_to_ptr.vmem [resolvable:$true] %s667
      %673 = dma.vmem_to_hbm [thread:$0]  %s668, 128, %s10, [#allocation4], 64, 64, 4
    $region69: #{tpu_custom_call.1} parent=1 // pred_fallthru
      _
    // Predicated region
    $region70: #{tpu_custom_call.1} parent=1 // pred_check
      _
    $region71: #{tpu_custom_call.1} parent=1 // pred_check_branch
      %675 = sbr.rel (0) target = $region73
    $region72: #{tpu_custom_call.1} parent=1 // pred_region
      %s677 = ssub.s32 512, 512
      %678 = vsyncadd [#allocation15], %s677
      %s679 = sshll.u32 [#allocation14], 4
      %s680 = int_to_ptr.vmem [resolvable:$true] %s679
      %685 = dma.vmem_to_hbm [thread:$0]  %s680, 512, %s11, [#allocation15], 256, 256, 16
    $region73: #{tpu_custom_call.1} parent=1 // pred_fallthru
      _
    // Predicated region
    $region74: #{tpu_custom_call.1} parent=1 // pred_check
      _
    $region75: #{tpu_custom_call.1} parent=1 // pred_check_branch
      %687 = sbr.rel (0) target = $region77
    $region76: #{tpu_custom_call.1} parent=1 // pred_region
      %688 = dma.done [#allocation4], 128
    $region77: #{tpu_custom_call.1} parent=1 // pred_fallthru
      _
    // Predicated region
    $region78: #{tpu_custom_call.1} parent=1 // pred_check
      _
    $region79: #{tpu_custom_call.1} parent=1 // pred_check_branch
      %690 = sbr.rel (0) target = $region81
    $region80: #{tpu_custom_call.1} parent=1 // pred_region
      %691 = dma.done [#allocation15], 512
    $region81: #{tpu_custom_call.1} parent=1 // pred_fallthru
      _
    %692 = vsyncpa [#allocation3], 1
    %693 = vsyncpa [#allocation6], 1
    %694 = vsyncpa [#allocation9], 1
    %695 = vsyncpa [#allocation12], 1
    %696 = vsyncpa [#allocation4], 1
    %697 = vsyncpa [#allocation15], 1

// kernel: tpu_custom_call.1
$region0: #{tpu_custom_call.1}
  #allocation0 [shape = 'u32[]', space=smem, size = 0x4, offset = 0x4, fixed_abs, tag = 'smem constant byte address 0x4 - core index']
  #allocation1 [shape = 'u32[144,128]{1,0:T(1,128)}', space=vmem, size = 0x12000, scoped, tag = 'internal scratch']
  %s0 = inlined_call_operand.hbm [shape: bf16[16,128], index: 0, kind: input, shape index: {}]
  %s1 = inlined_call_operand.hbm [shape: bf16[16,128], index: 1, kind: input, shape index: {}]
  %s2 = inlined_call_operand.hbm [shape: bf16[128,128], index: 2, kind: input, shape index: {}]
  %s3 = inlined_call_operand.vmem [shape: f32[1,128], index: 3, kind: input, shape index: {}]
  %s4 = inlined_call_operand.hbm [shape: bf16[128,256], index: 4, kind: input, shape index: {}]
  %s5 = inlined_call_operand.vmem [shape: f32[1,256], index: 5, kind: input, shape index: {}]
  %s6 = inlined_call_operand.hbm [shape: bf16[128,128], index: 6, kind: input, shape index: {}]
  %s7 = inlined_call_operand.vmem [shape: f32[1,128], index: 7, kind: input, shape index: {}]
  %s8 = inlined_call_operand.hbm [shape: bf16[128,128], index: 8, kind: input, shape index: {}]
  %s9 = inlined_call_operand.vmem [shape: f32[1,128], index: 9, kind: input, shape index: {}]
  %s10 = inlined_call_operand.hbm [shape: bf16[16,128], index: 10, kind: output, shape index: {0}]
  %s11 = inlined_call_operand.hbm [shape: f32[16,256], index: 11, kind: output, shape index: {1}]
  %12 = xla_tuple %s10, %s11
  %s13 = sld [smem:[#allocation0]]
  $region82: #{tpu_custom_call.1} parent=0
    _
  %s15 = ssub.s32 1, %s13
  %s16 = scalar_select 0, %s15, %s13
  $region1: #{tpu_custom_call.1} parent=0
    #allocation2 [shape = 'u8[4096]{0}', space=vmem, size = 0x1000, scoped, tag = 'input window, operand 0, single buffered']
    #allocation3 [shape = 's32[1]{0}', space=sflag, size = 0x4, scoped, tag = 'scoped memory for tpu_custom_call.1']
    #allocation4 [shape = 's32[1]{0}', space=sflag, size = 0x4, scoped, tag = 'scoped memory for tpu_custom_call.1']
    #allocation5 [shape = 'u8[4096]{0}', space=vmem, size = 0x1000, scoped, tag = 'input window, operand 1, single buffered']
    #allocation6 [shape = 's32[1]{0}', space=sflag, size = 0x4, scoped, tag = 'scoped memory for tpu_custom_call.1']
    #allocation7 [shape = 'u8[32768]{0}', space=vmem, size = 0x8000, scoped, tag = 'input window, operand 2, single buffered']
    #allocation8 [shape = 'u8[65536]{0}', space=vmem, size = 0x10000, scoped, tag = 'input window, operand 4, single buffered']
    #allocation9 [shape = 's32[1]{0}', space=sflag, size = 0x4, scoped, tag = 'scoped memory for tpu_custom_call.1']
    #allocation10 [shape = 'u8[32768]{0}', space=vmem, size = 0x8000, scoped, tag = 'input window, operand 6, single buffered']
    #allocation11 [shape = 'u8[32768]{0}', space=vmem, size = 0x8000, scoped, tag = 'input window, operand 8, single buffered']
    #allocation12 [shape = 's32[1]{0}', space=sflag, size = 0x4, scoped, tag = 'scoped memory for tpu_custom_call.1']
    #allocation13 [shape = 'u8[4096]{0}', space=vmem, size = 0x1000, scoped, tag = 'output window, operand 0, single buffered']
    #allocation14 [shape = 'u8[16384]{0}', space=vmem, size = 0x4000, scoped, tag = 'output window, operand 1, single buffered']
    #allocation15 [shape = 's32[1]{0}', space=sflag, size = 0x4, scoped, tag = 'scoped memory for tpu_custom_call.1']
    %17 = vsyncpa [#allocation3], 0
    %18 = vsyncpa [#allocation6], 0
    %19 = vsyncpa [#allocation9], 0
    %20 = vsyncpa [#allocation12], 0
    %21 = vsyncpa [#allocation4], 0
    %22 = vsyncpa [#allocation15], 0
    // Predicated region
    $region2: #{tpu_custom_call.1} parent=1 // pred_check
      _
    $region3: #{tpu_custom_call.1} parent=1 // pred_check_branch
      %24 = sbr.rel (0) target = $region5
    $region4: #{tpu_custom_call.1} parent=1 // pred_region
      %s26 = ssub.s32 128, 128
      %27 = vsyncadd [#allocation3], %s26
      %s28 = sshll.u32 [#allocation2], 4
      %s29 = int_to_ptr.vmem [resolvable:$true] %s28
      %34 = dma.hbm_to_vmem [thread:$0]  %s0, 128, %s29, [#allocation3], 64, 64, 4
    $region5: #{tpu_custom_call.1} parent=1 // pred_fallthru
      _
    // Predicated region
    $region6: #{tpu_custom_call.1} parent=1 // pred_check
      _
    $region7: #{tpu_custom_call.1} parent=1 // pred_check_branch
      %36 = sbr.rel (0) target = $region9
    $region8: #{tpu_custom_call.1} parent=1 // pred_region
      %s38 = ssub.s32 128, 128
      %39 = vsyncadd [#allocation6], %s38
      %s40 = sshll.u32 [#allocation5], 4
      %s41 = int_to_ptr.vmem [resolvable:$true] %s40
      %46 = dma.hbm_to_vmem [thread:$0]  %s1, 128, %s41, [#allocation6], 64, 64, 4
    $region9: #{tpu_custom_call.1} parent=1 // pred_fallthru
      _
    // Predicated region
    $region10: #{tpu_custom_call.1} parent=1 // pred_check
      _
    $region11: #{tpu_custom_call.1} parent=1 // pred_check_branch
      %48 = sbr.rel (0) target = $region13
    $region12: #{tpu_custom_call.1} parent=1 // pred_region
      %s50 = ssub.s32 1024, 1024
      %51 = vsyncadd [#allocation6], %s50
      %s52 = sshll.u32 [#allocation7], 4
      %s53 = int_to_ptr.vmem [resolvable:$true] %s52
      %58 = dma.hbm_to_vmem [thread:$0]  %s2, 1024, %s53, [#allocation6], 64, 64, 4
    $region13: #{tpu_custom_call.1} parent=1 // pred_fallthru
      _
    // Predicated region
    $region14: #{tpu_custom_call.1} parent=1 // pred_check
      _
    $region15: #{tpu_custom_call.1} parent=1 // pred_check_branch
      %60 = sbr.rel (0) target = $region17
    $region16: #{tpu_custom_call.1} parent=1 // pred_region
      _
    $region17: #{tpu_custom_call.1} parent=1 // pred_fallthru
      _
    // Predicated region
    $region18: #{tpu_custom_call.1} parent=1 // pred_check
      _
    $region19: #{tpu_custom_call.1} parent=1 // pred_check_branch
      %62 = sbr.rel (0) target = $region21
    $region20: #{tpu_custom_call.1} parent=1 // pred_region
      %s64 = ssub.s32 2048, 2048
      %65 = vsyncadd [#allocation9], %s64
      %s66 = sshll.u32 [#allocation8], 4
      %s67 = int_to_ptr.vmem [resolvable:$true] %s66
      %72 = dma.hbm_to_vmem [thread:$0]  %s4, 2048, %s67, [#allocation9], 128, 128, 8
    $region21: #{tpu_custom_call.1} parent=1 // pred_fallthru
      _
    // Predicated region
    $region22: #{tpu_custom_call.1} parent=1 // pred_check
      _
    $region23: #{tpu_custom_call.1} parent=1 // pred_check_branch
      %74 = sbr.rel (0) target = $region25
    $region24: #{tpu_custom_call.1} parent=1 // pred_region
      _
    $region25: #{tpu_custom_call.1} parent=1 // pred_fallthru
      _
    // Predicated region
    $region26: #{tpu_custom_call.1} parent=1 // pred_check
      _
    $region27: #{tpu_custom_call.1} parent=1 // pred_check_branch
      %76 = sbr.rel (0) target = $region29
    $region28: #{tpu_custom_call.1} parent=1 // pred_region
      %s78 = ssub.s32 1024, 1024
      %79 = vsyncadd [#allocation9], %s78
      %s80 = sshll.u32 [#allocation10], 4
      %s81 = int_to_ptr.vmem [resolvable:$true] %s80
      %86 = dma.hbm_to_vmem [thread:$0]  %s6, 1024, %s81, [#allocation9], 64, 64, 4
    $region29: #{tpu_custom_call.1} parent=1 // pred_fallthru
      _
    // Predicated region
    $region30: #{tpu_custom_call.1} parent=1 // pred_check
      _
    $region31: #{tpu_custom_call.1} parent=1 // pred_check_branch
      %88 = sbr.rel (0) target = $region33
    $region32: #{tpu_custom_call.1} parent=1 // pred_region
      _
    $region33: #{tpu_custom_call.1} parent=1 // pred_fallthru
      _
    // Predicated region
    $region34: #{tpu_custom_call.1} parent=1 // pred_check
      _
    $region35: #{tpu_custom_call.1} parent=1 // pred_check_branch
      %90 = sbr.rel (0) target = $region37
    $region36: #{tpu_custom_call.1} parent=1 // pred_region
      %s92 = ssub.s32 1024, 1024
      %93 = vsyncadd [#allocation12], %s92
      %s94 = sshll.u32 [#allocation11], 4
      %s95 = int_to_ptr.vmem [resolvable:$true] %s94
      %100 = dma.hbm_to_vmem [thread:$0]  %s8, 1024, %s95, [#allocation12], 64, 64, 4
    $region37: #{tpu_custom_call.1} parent=1 // pred_fallthru
      _
    // Predicated region
    $region38: #{tpu_custom_call.1} parent=1 // pred_check
      _
    $region39: #{tpu_custom_call.1} parent=1 // pred_check_branch
      %102 = sbr.rel (0) target = $region41
    $region40: #{tpu_custom_call.1} parent=1 // pred_region
      _
    $region41: #{tpu_custom_call.1} parent=1 // pred_fallthru
      _
    // Predicated region
    $region42: #{tpu_custom_call.1} parent=1 // pred_check
      _
    $region43: #{tpu_custom_call.1} parent=1 // pred_check_branch
      %104 = sbr.rel (0) target = $region45
    $region44: #{tpu_custom_call.1} parent=1 // pred_region
      %105 = dma.done [#allocation3], 128
    $region45: #{tpu_custom_call.1} parent=1 // pred_fallthru
      _
    // Predicated region
    $region46: #{tpu_custom_call.1} parent=1 // pred_check
      _
    $region47: #{tpu_custom_call.1} parent=1 // pred_check_branch
      %107 = sbr.rel (0) target = $region49
    $region48: #{tpu_custom_call.1} parent=1 // pred_region
      %108 = dma.done [#allocation6], 128
    $region49: #{tpu_custom_call.1} parent=1 // pred_fallthru
      _
    // Predicated region
    $region50: #{tpu_custom_call.1} parent=1 // pred_check
      _
    $region51: #{tpu_custom_call.1} parent=1 // pred_check_branch
      %110 = sbr.rel (0) target = $region53
    $region52: #{tpu_custom_call.1} parent=1 // pred_region
      %111 = dma.done [#allocation6], 1024
    $region53: #{tpu_custom_call.1} parent=1 // pred_fallthru
      _
    // Predicated region
    $region54: #{tpu_custom_call.1} parent=1 // pred_check
      _
    $region55: #{tpu_custom_call.1} parent=1 // pred_check_branch
      %113 = sbr.rel (0) target = $region57
    $region56: #{tpu_custom_call.1} parent=1 // pred_region
      %114 = dma.done [#allocation9], 2048
    $region57: #{tpu_custom_call.1} parent=1 // pred_fallthru
      _
    // Predicated region
    $region58: #{tpu_custom_call.1} parent=1 // pred_check
      _
    $region59: #{tpu_custom_call.1} parent=1 // pred_check_branch
      %116 = sbr.rel (0) target = $region61
    $region60: #{tpu_custom_call.1} parent=1 // pred_region
      %117 = dma.done [#allocation9], 1024
    $region61: #{tpu_custom_call.1} parent=1 // pred_fallthru
      _
    // Predicated region
    $region62: #{tpu_custom_call.1} parent=1 // pred_check
      _
    $region63: #{tpu_custom_call.1} parent=1 // pred_check_branch
      %119 = sbr.rel (0) target = $region65
    $region64: #{tpu_custom_call.1} parent=1 // pred_region
      %120 = dma.done [#allocation12], 1024
    $region65: #{tpu_custom_call.1} parent=1 // pred_fallthru
      _
    %v122 = vld [vmem:[#allocation2] sm:$0xf]
    %v123 = vld [vmem:[#allocation2 + $0x4] sm:$0xf]
    %v124 = vld [vmem:[#allocation7] sm:$0xf]
    %v125 = vld [vmem:[#allocation7 + $0x4] sm:$0xf]
    %v126 = vld [vmem:[#allocation7 + $0x8] sm:$0xf]
    %v127 = vld [vmem:[#allocation7 + $0xc] sm:$0xf]
    %v128 = vld [vmem:[#allocation7 + $0x10] sm:$0xf]
    %v129 = vld [vmem:[#allocation7 + $0x14] sm:$0xf]
    %v130 = vld [vmem:[#allocation7 + $0x18] sm:$0xf]
    %v131 = vld [vmem:[#allocation7 + $0x1c] sm:$0xf]
    %v132 = vld [vmem:[#allocation7 + $0x20] sm:$0xf]
    %v133 = vld [vmem:[#allocation7 + $0x24] sm:$0xf]
    %v134 = vld [vmem:[#allocation7 + $0x28] sm:$0xf]
    %v135 = vld [vmem:[#allocation7 + $0x2c] sm:$0xf]
    %v136 = vld [vmem:[#allocation7 + $0x30] sm:$0xf]
    %v137 = vld [vmem:[#allocation7 + $0x34] sm:$0xf]
    %v138 = vld [vmem:[#allocation7 + $0x38] sm:$0xf]
    %v139 = vld [vmem:[#allocation7 + $0x3c] sm:$0xf]
    %v140 = vld [vmem:[%s3] sm:$0x1]
    %v142 = vlaneseq
    %v143 = vshrl.u32 %v142, 7
    %v144 = vsub.s32 0, %v143
    %v145 = vrot.slane %v140, %v144
    %v149 = vunpack.c.l.b16 %v122
    %v150 = vunpack.c.l.b16 %v123
    %v151 = vpack.c.b16 %v150, %v149
    %v169 = vunpack.c.l.b16 %v124
    %v170 = vunpack.c.l.b16 %v125
    %v171 = vunpack.c.l.b16 %v126
    %v172 = vunpack.c.l.b16 %v127
    %v173 = vunpack.c.l.b16 %v128
    %v174 = vunpack.c.l.b16 %v129
    %v175 = vunpack.c.l.b16 %v130
    %v176 = vunpack.c.l.b16 %v131
    %v177 = vunpack.c.l.b16 %v132
    %v178 = vunpack.c.l.b16 %v133
    %v179 = vunpack.c.l.b16 %v134
    %v180 = vunpack.c.l.b16 %v135
    %v181 = vunpack.c.l.b16 %v136
    %v182 = vunpack.c.l.b16 %v137
    %v183 = vunpack.c.l.b16 %v138
    %v184 = vunpack.c.l.b16 %v139
    %v185 = vpack.c.b16 %v170, %v169
    %v186 = vpack.c.b16 %v172, %v171
    %v187 = vpack.c.b16 %v174, %v173
    %v188 = vpack.c.b16 %v176, %v175
    %v189 = vpack.c.b16 %v178, %v177
    %v190 = vpack.c.b16 %v180, %v179
    %v191 = vpack.c.b16 %v182, %v181
    %v192 = vpack.c.b16 %v184, %v183
    %201 = vmatprep.subr.bf16.mxu0 0
    %202 = vmatpush1.bf16.msra.mxu0 %v192
    %203 = vmatprep.subr.bf16.mxu0 0
    %204 = vmatpush1.bf16.msra.mxu0 %v191
    %205 = vmatprep.subr.bf16.mxu0 0
    %206 = vmatpush1.bf16.msra.mxu0 %v190
    %207 = vmatprep.subr.bf16.mxu0 0
    %208 = vmatpush1.bf16.msra.mxu0 %v189
    %209 = vmatprep.subr.bf16.mxu0 0
    %210 = vmatpush1.bf16.msra.mxu0 %v188
    %211 = vmatprep.subr.bf16.mxu0 0
    %212 = vmatpush1.bf16.msra.mxu0 %v187
    %213 = vmatprep.subr.bf16.mxu0 0
    %214 = vmatpush1.bf16.msra.mxu0 %v186
    %215 = vmatprep.subr.bf16.mxu0 0
    %216 = vmatpush1.bf16.msra.mxu0 %v185
    %217 = vmatprep.subr.bf16.mxu0 0
    %218 = vmatpush2.bf16.msra.mxu0 0
    %219 = vmatprep.subr.bf16.mxu0 0
    %220 = vmatpush2.bf16.msra.mxu0 0
    %221 = vmatprep.subr.bf16.mxu0 0
    %222 = vmatpush2.bf16.msra.mxu0 0
    %223 = vmatprep.subr.bf16.mxu0 0
    %224 = vmatpush2.bf16.msra.mxu0 0
    %225 = vmatprep.subr.bf16.mxu0 0
    %226 = vmatpush2.bf16.msra.mxu0 0
    %227 = vmatprep.subr.bf16.mxu0 0
    %228 = vmatpush2.bf16.msra.mxu0 0
    %229 = vmatprep.subr.bf16.mxu0 0
    %230 = vmatpush2.bf16.msra.mxu0 0
    %231 = vmatprep.subr.bf16.mxu0 0
    %232 = vmatpush2.bf16.msra.mxu0 0
    %233 = vmatprep.mubr.bf16.mxu0 0
    %234 = vmatmul.mubr.bf16.gmra.mxu0 %v151
    %v235 = vpop.f32.mrf.mxu0
    %v236 = vadd.f32 %v145, %v235
    %v237 = vpop.f32.mrf.mxu0
    %v238 = vpop.f32.mrf.mxu0
    %v239 = vadd.f32 %v145, %v238
    %v240 = vpop.f32.mrf.mxu0
    %241 = vdwg.mxu0
    %v242 = vmax.f32 %v236, 0.0
    %v243 = vmax.f32 %v239, 0.0
    %v244 = vpack.c.bf16 %v243, %v242
    %v245 = vld [vmem:[#allocation8] sm:$0xff]
    %v246 = vld [vmem:[#allocation8 + $0x8] sm:$0xff]
    %v247 = vld [vmem:[#allocation8 + $0x10] sm:$0xff]
    %v248 = vld [vmem:[#allocation8 + $0x18] sm:$0xff]
    %v249 = vld [vmem:[#allocation8 + $0x20] sm:$0xff]
    %v250 = vld [vmem:[#allocation8 + $0x28] sm:$0xff]
    %v251 = vld [vmem:[#allocation8 + $0x30] sm:$0xff]
    %v252 = vld [vmem:[#allocation8 + $0x38] sm:$0xff]
    %v253 = vld [vmem:[#allocation8 + $0x40] sm:$0xff]
    %v254 = vld [vmem:[#allocation8 + $0x48] sm:$0xff]
    %v255 = vld [vmem:[#allocation8 + $0x50] sm:$0xff]
    %v256 = vld [vmem:[#allocation8 + $0x58] sm:$0xff]
    %v257 = vld [vmem:[#allocation8 + $0x60] sm:$0xff]
    %v258 = vld [vmem:[#allocation8 + $0x68] sm:$0xff]
    %v259 = vld [vmem:[#allocation8 + $0x70] sm:$0xff]
    %v260 = vld [vmem:[#allocation8 + $0x78] sm:$0xff]
    %v261 = vld [vmem:[%s5] sm:$0x3]
    %v263 = vlaneseq
    %v264 = vshrl.u32 %v263, 7
    %v265 = vsub.s32 0, %v264
    %v266 = vrot.slane %v261, %v265
    %v267 = vlaneseq
    %v268 = vshrl.u32 %v267, 7
    %v269 = vsub.s32 1, %v268
    %v270 = vrot.slane %v261, %v269
    %v289 = vunpack.c.l.b16 %v245
    %v290 = vunpack.c.h.b16 %v245
    %v291 = vunpack.c.l.b16 %v246
    %v292 = vunpack.c.h.b16 %v246
    %v293 = vunpack.c.l.b16 %v247
    %v294 = vunpack.c.h.b16 %v247
    %v295 = vunpack.c.l.b16 %v248
    %v296 = vunpack.c.h.b16 %v248
    %v297 = vunpack.c.l.b16 %v249
    %v298 = vunpack.c.h.b16 %v249
    %v299 = vunpack.c.l.b16 %v250
    %v300 = vunpack.c.h.b16 %v250
    %v301 = vunpack.c.l.b16 %v251
    %v302 = vunpack.c.h.b16 %v251
    %v303 = vunpack.c.l.b16 %v252
    %v304 = vunpack.c.h.b16 %v252
    %v305 = vunpack.c.l.b16 %v253
    %v306 = vunpack.c.h.b16 %v253
    %v307 = vunpack.c.l.b16 %v254
    %v308 = vunpack.c.h.b16 %v254
    %v309 = vunpack.c.l.b16 %v255
    %v310 = vunpack.c.h.b16 %v255
    %v311 = vunpack.c.l.b16 %v256
    %v312 = vunpack.c.h.b16 %v256
    %v313 = vunpack.c.l.b16 %v257
    %v314 = vunpack.c.h.b16 %v257
    %v315 = vunpack.c.l.b16 %v258
    %v316 = vunpack.c.h.b16 %v258
    %v317 = vunpack.c.l.b16 %v259
    %v318 = vunpack.c.h.b16 %v259
    %v319 = vunpack.c.l.b16 %v260
    %v320 = vunpack.c.h.b16 %v260
    %v321 = vpack.c.b16 %v291, %v289
    %v322 = vpack.c.b16 %v292, %v290
    %v323 = vpack.c.b16 %v295, %v293
    %v324 = vpack.c.b16 %v296, %v294
    %v325 = vpack.c.b16 %v299, %v297
    %v326 = vpack.c.b16 %v300, %v298
    %v327 = vpack.c.b16 %v303, %v301
    %v328 = vpack.c.b16 %v304, %v302
    %v329 = vpack.c.b16 %v307, %v305
    %v330 = vpack.c.b16 %v308, %v306
    %v331 = vpack.c.b16 %v311, %v309
    %v332 = vpack.c.b16 %v312, %v310
    %v333 = vpack.c.b16 %v315, %v313
    %v334 = vpack.c.b16 %v316, %v314
    %v335 = vpack.c.b16 %v319, %v317
    %v336 = vpack.c.b16 %v320, %v318
    %353 = vmatprep.subr.bf16.mxu0 %v336
    %354 = vmatpush1.bf16.msra.mxu0 %v335
    %355 = vmatprep.subr.bf16.mxu0 %v334
    %356 = vmatpush1.bf16.msra.mxu0 %v333
    %357 = vmatprep.subr.bf16.mxu0 %v332
    %358 = vmatpush1.bf16.msra.mxu0 %v331
    %359 = vmatprep.subr.bf16.mxu0 %v330
    %360 = vmatpush1.bf16.msra.mxu0 %v329
    %361 = vmatprep.subr.bf16.mxu0 %v328
    %362 = vmatpush1.bf16.msra.mxu0 %v327
    %363 = vmatprep.subr.bf16.mxu0 %v326
    %364 = vmatpush1.bf16.msra.mxu0 %v325
    %365 = vmatprep.subr.bf16.mxu0 %v324
    %366 = vmatpush1.bf16.msra.mxu0 %v323
    %367 = vmatprep.subr.bf16.mxu0 %v322
    %368 = vmatpush1.bf16.msra.mxu0 %v321
    %369 = vmatprep.subr.bf16.mxu0 0
    %370 = vmatpush2.bf16.msra.mxu0 0
    %371 = vmatprep.subr.bf16.mxu0 0
    %372 = vmatpush2.bf16.msra.mxu0 0
    %373 = vmatprep.subr.bf16.mxu0 0
    %374 = vmatpush2.bf16.msra.mxu0 0
    %375 = vmatprep.subr.bf16.mxu0 0
    %376 = vmatpush2.bf16.msra.mxu0 0
    %377 = vmatprep.subr.bf16.mxu0 0
    %378 = vmatpush2.bf16.msra.mxu0 0
    %379 = vmatprep.subr.bf16.mxu0 0
    %380 = vmatpush2.bf16.msra.mxu0 0
    %381 = vmatprep.subr.bf16.mxu0 0
    %382 = vmatpush2.bf16.msra.mxu0 0
    %383 = vmatprep.subr.bf16.mxu0 0
    %384 = vmatpush2.bf16.msra.mxu0 0
    %385 = vmatprep.mubr.bf16.mxu0 0
    %386 = vmatmul.mubr.bf16.gmra.mxu0 %v244
    %v387 = vpop.f32.mrf.mxu0
    %v388 = vadd.f32 %v266, %v387
    %v389 = vpop.f32.mrf.mxu0
    %v390 = vadd.f32 %v270, %v389
    %v391 = vpop.f32.mrf.mxu0
    %v392 = vadd.f32 %v266, %v391
    %v393 = vpop.f32.mrf.mxu0
    %v394 = vadd.f32 %v270, %v393
    %395 = vdwg.mxu0
    %v396 = vmul.f32 %v390, 0.5
    %v397 = vmul.f32 %v394, 0.5
    %v398 = vmul.f32 %v396, 1.442695
    %v399 = vpow.pop %v398
    %v400 = vmul.f32 %v397, 1.442695
    %v401 = vpow.pop %v400
    %v402 = vld [vmem:[#allocation5] sm:$0xf]
    %v403 = vld [vmem:[#allocation5 + $0x4] sm:$0xf]
    %v404 = vunpack.c.l.bf16 %v402
    %v405 = vunpack.c.l.bf16 %v403
    %v406 = vmul.f32 %v399, %v404
    %v407 = vmul.f32 %v401, %v405
    %v408 = vadd.f32 %v388, %v406
    %v409 = vadd.f32 %v392, %v407
    %v410 = vpack.c.bf16 %v409, %v408
    %v411 = vld [vmem:[#allocation10] sm:$0xf]
    %v412 = vld [vmem:[#allocation10 + $0x4] sm:$0xf]
    %v413 = vld [vmem:[#allocation10 + $0x8] sm:$0xf]
    %v414 = vld [vmem:[#allocation10 + $0xc] sm:$0xf]
    %v415 = vld [vmem:[#allocation10 + $0x10] sm:$0xf]
    %v416 = vld [vmem:[#allocation10 + $0x14] sm:$0xf]
    %v417 = vld [vmem:[#allocation10 + $0x18] sm:$0xf]
    %v418 = vld [vmem:[#allocation10 + $0x1c] sm:$0xf]
    %v419 = vld [vmem:[#allocation10 + $0x20] sm:$0xf]
    %v420 = vld [vmem:[#allocation10 + $0x24] sm:$0xf]
    %v421 = vld [vmem:[#allocation10 + $0x28] sm:$0xf]
    %v422 = vld [vmem:[#allocation10 + $0x2c] sm:$0xf]
    %v423 = vld [vmem:[#allocation10 + $0x30] sm:$0xf]
    %v424 = vld [vmem:[#allocation10 + $0x34] sm:$0xf]
    %v425 = vld [vmem:[#allocation10 + $0x38] sm:$0xf]
    %v426 = vld [vmem:[#allocation10 + $0x3c] sm:$0xf]
    %v427 = vld [vmem:[%s7] sm:$0x1]
    %v429 = vlaneseq
    %v430 = vshrl.u32 %v429, 7
    %v431 = vsub.s32 0, %v430
    %v432 = vrot.slane %v427, %v431
    %v450 = vunpack.c.l.b16 %v411
    %v451 = vunpack.c.l.b16 %v412
    %v452 = vunpack.c.l.b16 %v413
    %v453 = vunpack.c.l.b16 %v414
    %v454 = vunpack.c.l.b16 %v415
    %v455 = vunpack.c.l.b16 %v416
    %v456 = vunpack.c.l.b16 %v417
    %v457 = vunpack.c.l.b16 %v418
    %v458 = vunpack.c.l.b16 %v419
    %v459 = vunpack.c.l.b16 %v420
    %v460 = vunpack.c.l.b16 %v421
    %v461 = vunpack.c.l.b16 %v422
    %v462 = vunpack.c.l.b16 %v423
    %v463 = vunpack.c.l.b16 %v424
    %v464 = vunpack.c.l.b16 %v425
    %v465 = vunpack.c.l.b16 %v426
    %v466 = vpack.c.b16 %v451, %v450
    %v467 = vpack.c.b16 %v453, %v452
    %v468 = vpack.c.b16 %v455, %v454
    %v469 = vpack.c.b16 %v457, %v456
    %v470 = vpack.c.b16 %v459, %v458
    %v471 = vpack.c.b16 %v461, %v460
    %v472 = vpack.c.b16 %v463, %v462
    %v473 = vpack.c.b16 %v465, %v464
    %482 = vmatprep.subr.bf16.mxu0 0
    %483 = vmatpush1.bf16.msra.mxu0 %v473
    %484 = vmatprep.subr.bf16.mxu0 0
    %485 = vmatpush1.bf16.msra.mxu0 %v472
    %486 = vmatprep.subr.bf16.mxu0 0
    %487 = vmatpush1.bf16.msra.mxu0 %v471
    %488 = vmatprep.subr.bf16.mxu0 0
    %489 = vmatpush1.bf16.msra.mxu0 %v470
    %490 = vmatprep.subr.bf16.mxu0 0
    %491 = vmatpush1.bf16.msra.mxu0 %v469
    %492 = vmatprep.subr.bf16.mxu0 0
    %493 = vmatpush1.bf16.msra.mxu0 %v468
    %494 = vmatprep.subr.bf16.mxu0 0
    %495 = vmatpush1.bf16.msra.mxu0 %v467
    %496 = vmatprep.subr.bf16.mxu0 0
    %497 = vmatpush1.bf16.msra.mxu0 %v466
    %498 = vmatprep.subr.bf16.mxu0 0
    %499 = vmatpush2.bf16.msra.mxu0 0
    %500 = vmatprep.subr.bf16.mxu0 0
    %501 = vmatpush2.bf16.msra.mxu0 0
    %502 = vmatprep.subr.bf16.mxu0 0
    %503 = vmatpush2.bf16.msra.mxu0 0
    %504 = vmatprep.subr.bf16.mxu0 0
    %505 = vmatpush2.bf16.msra.mxu0 0
    %506 = vmatprep.subr.bf16.mxu0 0
    %507 = vmatpush2.bf16.msra.mxu0 0
    %508 = vmatprep.subr.bf16.mxu0 0
    %509 = vmatpush2.bf16.msra.mxu0 0
    %510 = vmatprep.subr.bf16.mxu0 0
    %511 = vmatpush2.bf16.msra.mxu0 0
    %512 = vmatprep.subr.bf16.mxu0 0
    %513 = vmatpush2.bf16.msra.mxu0 0
    %514 = vmatprep.mubr.bf16.mxu0 0
    %515 = vmatmul.mubr.bf16.gmra.mxu0 %v410
    %v516 = vpop.f32.mrf.mxu0
    %v517 = vadd.f32 %v432, %v516
    %v518 = vpop.f32.mrf.mxu0
    %v519 = vpop.f32.mrf.mxu0
    %v520 = vadd.f32 %v432, %v519
    %v521 = vpop.f32.mrf.mxu0
    %522 = vdwg.mxu0
    %v523 = vmax.f32 %v517, 0.0
    %v524 = vmax.f32 %v520, 0.0
    %v525 = vpack.c.bf16 %v524, %v523
    %v526 = vld [vmem:[#allocation11] sm:$0xf]
    %v527 = vld [vmem:[#allocation11 + $0x4] sm:$0xf]
    %v528 = vld [vmem:[#allocation11 + $0x8] sm:$0xf]
    %v529 = vld [vmem:[#allocation11 + $0xc] sm:$0xf]
    %v530 = vld [vmem:[#allocation11 + $0x10] sm:$0xf]
    %v531 = vld [vmem:[#allocation11 + $0x14] sm:$0xf]
    %v532 = vld [vmem:[#allocation11 + $0x18] sm:$0xf]
    %v533 = vld [vmem:[#allocation11 + $0x1c] sm:$0xf]
    %v534 = vld [vmem:[#allocation11 + $0x20] sm:$0xf]
    %v535 = vld [vmem:[#allocation11 + $0x24] sm:$0xf]
    %v536 = vld [vmem:[#allocation11 + $0x28] sm:$0xf]
    %v537 = vld [vmem:[#allocation11 + $0x2c] sm:$0xf]
    %v538 = vld [vmem:[#allocation11 + $0x30] sm:$0xf]
    %v539 = vld [vmem:[#allocation11 + $0x34] sm:$0xf]
    %v540 = vld [vmem:[#allocation11 + $0x38] sm:$0xf]
    %v541 = vld [vmem:[#allocation11 + $0x3c] sm:$0xf]
    %v542 = vld [vmem:[%s9] sm:$0x1]
    %v544 = vlaneseq
    %v545 = vshrl.u32 %v544, 7
    %v546 = vsub.s32 0, %v545
    %v547 = vrot.slane %v542, %v546
    %v565 = vunpack.c.l.b16 %v526
    %v566 = vunpack.c.l.b16 %v527
    %v567 = vunpack.c.l.b16 %v528
    %v568 = vunpack.c.l.b16 %v529
    %v569 = vunpack.c.l.b16 %v530
    %v570 = vunpack.c.l.b16 %v531
    %v571 = vunpack.c.l.b16 %v532
    %v572 = vunpack.c.l.b16 %v533
    %v573 = vunpack.c.l.b16 %v534
    %v574 = vunpack.c.l.b16 %v535
    %v575 = vunpack.c.l.b16 %v536
    %v576 = vunpack.c.l.b16 %v537
    %v577 = vunpack.c.l.b16 %v538
    %v578 = vunpack.c.l.b16 %v539
    %v579 = vunpack.c.l.b16 %v540
    %v580 = vunpack.c.l.b16 %v541
    %v581 = vpack.c.b16 %v566, %v565
    %v582 = vpack.c.b16 %v568, %v567
    %v583 = vpack.c.b16 %v570, %v569
    %v584 = vpack.c.b16 %v572, %v571
    %v585 = vpack.c.b16 %v574, %v573
    %v586 = vpack.c.b16 %v576, %v575
    %v587 = vpack.c.b16 %v578, %v577
    %v588 = vpack.c.b16 %v580, %v579
    %597 = vmatprep.subr.bf16.mxu0 0
    %598 = vmatpush1.bf16.msra.mxu0 %v588
    %599 = vmatprep.subr.bf16.mxu0 0
    %600 = vmatpush1.bf16.msra.mxu0 %v587
    %601 = vmatprep.subr.bf16.mxu0 0
    %602 = vmatpush1.bf16.msra.mxu0 %v586
    %603 = vmatprep.subr.bf16.mxu0 0
    %604 = vmatpush1.bf16.msra.mxu0 %v585
    %605 = vmatprep.subr.bf16.mxu0 0
    %606 = vmatpush1.bf16.msra.mxu0 %v584
    %607 = vmatprep.subr.bf16.mxu0 0
    %608 = vmatpush1.bf16.msra.mxu0 %v583
    %609 = vmatprep.subr.bf16.mxu0 0
    %610 = vmatpush1.bf16.msra.mxu0 %v582
    %611 = vmatprep.subr.bf16.mxu0 0
    %612 = vmatpush1.bf16.msra.mxu0 %v581
    %613 = vmatprep.subr.bf16.mxu0 0
    %614 = vmatpush2.bf16.msra.mxu0 0
    %615 = vmatprep.subr.bf16.mxu0 0
    %616 = vmatpush2.bf16.msra.mxu0 0
    %617 = vmatprep.subr.bf16.mxu0 0
    %618 = vmatpush2.bf16.msra.mxu0 0
    %619 = vmatprep.subr.bf16.mxu0 0
    %620 = vmatpush2.bf16.msra.mxu0 0
    %621 = vmatprep.subr.bf16.mxu0 0
    %622 = vmatpush2.bf16.msra.mxu0 0
    %623 = vmatprep.subr.bf16.mxu0 0
    %624 = vmatpush2.bf16.msra.mxu0 0
    %625 = vmatprep.subr.bf16.mxu0 0
    %626 = vmatpush2.bf16.msra.mxu0 0
    %627 = vmatprep.subr.bf16.mxu0 0
    %628 = vmatpush2.bf16.msra.mxu0 0
    %629 = vmatprep.mubr.bf16.mxu0 0
    %630 = vmatmul.mubr.bf16.gmra.mxu0 %v525
    %v631 = vpop.f32.mrf.mxu0
    %v632 = vadd.f32 %v547, %v631
    %v633 = vpop.f32.mrf.mxu0
    %v634 = vpop.f32.mrf.mxu0
    %v635 = vadd.f32 %v547, %v634
    %v636 = vpop.f32.mrf.mxu0
    %637 = vdwg.mxu0
    %v638 = vsub.f32 0.0, %v632
    %v639 = vsub.f32 0.0, %v635
    %v640 = vmul.f32 %v638, 1.442695
    %v641 = vpow.pop %v640
    %v642 = vmul.f32 %v639, 1.442695
    %v643 = vpow.pop %v642
    %v644 = vadd.f32 %v641, 1.0
    %v645 = vadd.f32 %v643, 1.0
    %v646 = vrcp.pop %v644
    %v647 = vrcp.pop %v645
    %v648 = vpack.c.bf16 %v647, %v646
    %v650 = vunpack.c.l.b16 %v648
    %v651 = vunpack.c.h.b16 %v648
    %v652 = vpack.c.b16 %v650, %v650
    %v653 = vpack.c.b16 %v651, %v651
    %656 = vst [vmem:[#allocation13] sm:$0xf] %v652
    %657 = vst [vmem:[#allocation13 + $0x4] sm:$0xf] %v653
    %658 = vst [vmem:[#allocation14] sm:$0xff] %v388
    %659 = vst [vmem:[#allocation14 + $0x8] sm:$0xff] %v390
    %660 = vst [vmem:[#allocation14 + $0x10] sm:$0xff] %v392
    %661 = vst [vmem:[#allocation14 + $0x18] sm:$0xff] %v394
    // Predicated region
    $region66: #{tpu_custom_call.1} parent=1 // pred_check
      _
    $region67: #{tpu_custom_call.1} parent=1 // pred_check_branch
      %663 = sbr.rel (0) target = $region69
    $region68: #{tpu_custom_call.1} parent=1 // pred_region
      %s665 = ssub.s32 128, 128
      %666 = vsyncadd [#allocation4], %s665
      %s667 = sshll.u32 [#allocation13], 4
      %s668 = int_to_ptr.vmem [resolvable:$true] %s667
      %673 = dma.vmem_to_hbm [thread:$0]  %s668, 128, %s10, [#allocation4], 64, 64, 4
    $region69: #{tpu_custom_call.1} parent=1 // pred_fallthru
      _
    // Predicated region
    $region70: #{tpu_custom_call.1} parent=1 // pred_check
      _
    $region71: #{tpu_custom_call.1} parent=1 // pred_check_branch
      %675 = sbr.rel (0) target = $region73
    $region72: #{tpu_custom_call.1} parent=1 // pred_region
      %s677 = ssub.s32 512, 512
      %678 = vsyncadd [#allocation15], %s677
      %s679 = sshll.u32 [#allocation14], 4
      %s680 = int_to_ptr.vmem [resolvable:$true] %s679
      %685 = dma.vmem_to_hbm [thread:$0]  %s680, 512, %s11, [#allocation15], 256, 256, 16
    $region73: #{tpu_custom_call.1} parent=1 // pred_fallthru
      _
    // Predicated region
    $region74: #{tpu_custom_call.1} parent=1 // pred_check
      _
    $region75: #{tpu_custom_call.1} parent=1 // pred_check_branch
      %687 = sbr.rel (0) target = $region77
    $region76: #{tpu_custom_call.1} parent=1 // pred_region
      %688 = dma.done [#allocation4], 128
    $region77: #{tpu_custom_call.1} parent=1 // pred_fallthru
      _
    // Predicated region
    $region78: #{tpu_custom_call.1} parent=1 // pred_check
      _
    $region79: #{tpu_custom_call.1} parent=1 // pred_check_branch
      %690 = sbr.rel (0) target = $region81
    $region80: #{tpu_custom_call.1} parent=1 // pred_region
      %691 = dma.done [#allocation15], 512
    $region81: #{tpu_custom_call.1} parent=1 // pred_fallthru
      _
    %692 = vsyncpa [#allocation3], 1
    %693 = vsyncpa [#allocation6], 1
    %694 = vsyncpa [#allocation9], 1
    %695 = vsyncpa [#allocation12], 1
    %696 = vsyncpa [#allocation4], 1
    %697 = vsyncpa [#allocation15], 1

</llo_original>
